<compile_context>
chip_gen: v6e
topology: v6e:2x2x1
jax: 0.10.0
libtpu: 0.0.40
codegen_flags: <defaults>
</compile_context>

<pallas_src>
import functools

import jax
import jax.numpy as jnp
from jax import lax
from jax.experimental import pallas as pl
from jax.experimental.pallas import tpu as pltpu

_LANE = 128
_NEG_BIG = -1e30  # finite "-inf" so 0 * _NEG_BIG stays 0 (no NaN on padded entries)


def _round_up(x, m):
    return (x + m - 1) // m * m


def _vmem_limit_bytes():
    """Generation-aware scoped-VMEM budget (~60% of physical per-core VMEM)."""
    try:
        cap = int(pltpu.get_tpu_info().vmem_capacity_bytes)
    except Exception:
        cap = 64 * 1024 * 1024  # conservative fallback (v7x per-TC physical VMEM)
    return int(max(32 * 1024 * 1024, min(cap * 0.6, 96 * 1024 * 1024)))


def _pick_tile_n(n_pad, vmem_limit_bytes):
    """Largest lane-aligned row tile whose f32 [tile, n_pad] slabs fit the budget."""
    def fits(t):
        # ~8 live f32 [tile, n_pad] slabs (gram/exp temporaries + kernel-B scratches).
        return 8 * t * n_pad * 4 <= vmem_limit_bytes // 2

    if n_pad <= 512 and fits(n_pad):
        return n_pad
    for t in (512, 256, 128):
        if n_pad % t == 0 and fits(t):
            return t
    return 128


def _bf16_elementwise_ok():
    """bf16 VPU/EUP exists on v6e/v7x; v5e and older must stay f32."""
    try:
        kind = jax.devices()[0].device_kind.lower()
    except Exception:
        return False
    return ("v6" in kind) or ("v7" in kind) or ("v8" in kind)


def _all_branch_kernel(x_ref, yt_ref, bias_ref, cmask_ref, rlab_ref, rsum_ref,
                       out_ref, s_acc, *, num_class, inv_t, needs_col_bias, exp_bf16):
    """'all' branch: one [TILE_N, N_pad] gram slab per grid step.

    grid = (i: row class [parallel], r: row tile [parallel], cp: column class [arbitrary])

    x_ref    : (1, TILE_N, D_pad) bf16  class-i features, rows r*TILE_N..(r+1)*TILE_N
    yt_ref   : (1, D_pad, N_pad)  bf16  class-cp features, pre-transposed (MXU rhs)
    bias_ref : (1, N_pad)         f32   0 on real contrast rows, -1e30 on padding
    cmask_ref: (1, 1, N_pad)      f32   labels[:, cp]  (column mask; 0 on padding)
    rlab_ref : (1, TILE_N, 1)     f32   labels[:, i]   (row labels for this tile)
    rsum_ref : (1, TILE_N, 1)     f32   analytic all_mask row sums for these rows
    out_ref  : (1, 1, 1, 1)       f32   sum_n log(s_n) * rowsum_n over this tile
    s_acc    : (TILE_N, 1)        f32   running masked exp-sum per row (across cp)
    """
    i = pl.program_id(0)
    r = pl.program_id(1)
    cp = pl.program_id(2)

    blk = jnp.dot(x_ref[0], yt_ref[0],
                  preferred_element_type=jnp.float32) * jnp.float32(inv_t)
    tile_n, n_cols = blk.shape

    # torch: per-(n, c, c') max over the real contrast rows m only.  NOTE: not a true
    # logsumexp — different cp blocks subtract different maxes before the mixed sum.
    if needs_col_bias:
        mx = jnp.max(blk + bias_ref[...], axis=1, keepdims=True)
    else:
        mx = jnp.max(blk, axis=1, keepdims=True)
    z = blk - mx

    if exp_bf16:
        # v6e/v7x: EUP/VPU handle packed bf16 -> ~2x on the binding slot; the row
        # accumulation below stays f32.
        e = jnp.exp(z.astype(jnp.bfloat16))
        ep = e * cmask_ref[0].astype(jnp.bfloat16)
        contrib = jnp.sum(ep.astype(jnp.float32), axis=1, keepdims=True)
    else:
        e = jnp.exp(z)
        ep = e * cmask_ref[0]
        contrib = jnp.sum(ep, axis=1, keepdims=True)

    @pl.when(cp == 0)
    def _():
        s_acc[...] = jnp.zeros_like(s_acc)

    s_acc[...] += contrib

    # Self-pair (m == n AND cp == i) removal: only diagonal class blocks contain it,
    # so the iota/compare/select cost is paid on 1/C of the steps only.
    @pl.when(i == cp)
    def _():
        row_g = lax.broadcasted_iota(jnp.int32, (tile_n, n_cols), 0) + r * tile_n
        col_g = lax.broadcasted_iota(jnp.int32, (tile_n, n_cols), 1)
        dsel = (row_g == col_g).astype(ep.dtype)
        s_acc[...] -= jnp.sum((ep * dsel).astype(jnp.float32), axis=1, keepdims=True)

    @pl.when(cp == num_class - 1)
    def _():
        s = rlab_ref[0] * s_acc[...]
        s = jnp.where(s <= 0.0, jnp.float32(1.0), s)       # torch: logits_all[<=0] = 1
        out_ref[0, 0] = jnp.sum(jnp.log(s) * rsum_ref[0], keepdims=True)


def _intra_kernel(x_ref, yt_ref, cmask_ref, rlab_ref, out_ref,
                  maxc, msum, acc, *, num_class, inv_t):
    """'intra' branch: per-class gram slab D_c with a running class-max.

    grid = (r: row tile [parallel], c: class [arbitrary])
    Uses  sum_c m_c^2*(D_c - max_c' D_c') = sum_c m_c^2*D_c - (max_c D_c)*sum_c m_c^2 .
    The off-diagonal mask is dropped: D_c[n,n] = 1/T for every class after L2
    normalization, so the diagonal contribution cancels analytically (up to bf16
    operand rounding); padded rows/columns carry zero labels.
    """
    c = pl.program_id(1)
    dc = jnp.dot(x_ref[0], yt_ref[0],
                 preferred_element_type=jnp.float32) * jnp.float32(inv_t)

    lr2 = cmask_ref[0] * cmask_ref[0]          # [1, N_pad]    labels[:, c]^2
    lc2 = rlab_ref[0] * rlab_ref[0]            # [TILE_N, 1]   labels[:, c]^2
    m2 = lc2 * lr2                             # mask_intra[c]^2 (no eye; see docstring)

    @pl.when(c == 0)
    def _():
        maxc[...] = jnp.full_like(maxc, _NEG_BIG)
        msum[...] = jnp.zeros_like(msum)
        acc[...] = jnp.zeros_like(acc)

    maxc[...] = jnp.maximum(maxc[...], dc)
    msum[...] += m2
    acc[...] += jnp.sum(m2 * dc, keepdims=True)

    @pl.when(c == num_class - 1)
    def _():
        out_ref[0] = acc[...] - jnp.sum(maxc[...] * msum[...], keepdims=True)


def multi_supcon_loss(features, labels, temperature=0.2, contrast_mode='all',
                      base_temperature=0.2):
    assert contrast_mode == 'all'
    B, V, C, D = features.shape
    N = B * V
    n_pad = _round_up(max(N, _LANE), _LANE)
    d_pad = _round_up(max(D, _LANE), _LANE)
    inv_t = 1.0 / temperature

    vmem_limit = _vmem_limit_bytes()
    tile_n = _pick_tile_n(n_pad, vmem_limit)
    n_row_blocks = n_pad // tile_n
    exp_bf16 = _bf16_elementwise_ok()

    # contrast_feature (row n = v*B + b), L2-normalized once (rsqrt, torch eps=1e-12).
    cf = jnp.transpose(features, (1, 0, 2, 3)).reshape(N, C, D).astype(jnp.float32)
    cf = cf * lax.rsqrt(jnp.maximum(jnp.sum(cf * cf, axis=-1, keepdims=True), 1e-24))

    # Class-major [C, N_pad, D_pad]; zero padding changes neither the dots nor the norms.
    # TODO(synk): when D << 128 the contraction-dim padding could be trimmed to the bf16
    #             sublane multiple (16) — kept at 128 since the kernels are VPU/EUP-bound.
    ycm = jnp.transpose(cf, (1, 0, 2))
    ycm = jnp.pad(ycm, ((0, 0), (0, n_pad - N), (0, d_pad - D)))
    x3 = ycm.astype(jnp.bfloat16)                               # [C, N_pad, D_pad] MXU lhs
    yt3 = jnp.transpose(ycm, (0, 2, 1)).astype(jnp.bfloat16)    # [C, D_pad, N_pad] MXU rhs

    # Label-only quantities (tiny). Padded rows get zero labels -> masks vanish.
    lrep = jnp.tile(labels.astype(jnp.float32), (V, 1))         # [N, C]
    lt = jnp.pad(lrep.T, ((0, 0), (0, n_pad - N)))              # [C, N_pad]
    s_total = jnp.sum(lrep)
    rowsum = lt * (s_total - lt)                                # analytic sum_j all_mask[r, j]
    mask_sum = jnp.sum(jnp.sum(lrep, axis=0) ** 2 - jnp.sum(lrep * lrep, axis=0))

    cmask3 = lt[:, None, :]                                     # [C, 1, N_pad]
    rlab3 = lt[:, :, None]                                      # [C, N_pad, 1]
    rsum3 = rowsum[:, :, None]                                  # [C, N_pad, 1]

    # Column-validity bias for the per-block max: 0 on real rows, -1e30 on padding.
    col_bias = jnp.where(jnp.arange(n_pad) < N, 0.0,
                         _NEG_BIG).astype(jnp.float32)[None, :]  # [1, N_pad]

    R = n_row_blocks

    # ---- kernel A: 'all' branch denominator, row-tiled, cp reduction innermost ----
    denom = pl.pallas_call(
        functools.partial(_all_branch_kernel, num_class=C, inv_t=inv_t,
                          needs_col_bias=(n_pad != N), exp_bf16=exp_bf16),
        out_shape=jax.ShapeDtypeStruct((C, R, 1, 1), jnp.float32),
        grid=(C, R, C),
        in_specs=[
            pl.BlockSpec((1, tile_n, d_pad), lambda i, r, cp: (i, r, 0)),   # x3 (resident)
            pl.BlockSpec((1, d_pad, n_pad), lambda i, r, cp: (cp, 0, 0)),   # yt3 (streamed)
            pl.BlockSpec((1, n_pad), lambda i, r, cp: (0, 0)),              # column bias
            pl.BlockSpec((1, 1, n_pad), lambda i, r, cp: (cp, 0, 0)),       # column labels
            pl.BlockSpec((1, tile_n, 1), lambda i, r, cp: (i, r, 0)),       # row labels
            pl.BlockSpec((1, tile_n, 1), lambda i, r, cp: (i, r, 0)),       # analytic row sums
        ],
        out_specs=pl.BlockSpec((1, 1, 1, 1), lambda i, r, cp: (i, r, 0, 0)),
        scratch_shapes=[pltpu.VMEM((tile_n, 1), jnp.float32)],
        compiler_params=pltpu.CompilerParams(
            dimension_semantics=("parallel", "parallel", "arbitrary"),
            vmem_limit_bytes=vmem_limit),
    )(x3, yt3, col_bias, cmask3, rlab3, rsum3)

    # ---- kernel B: 'intra' branch, row-tiled, class reduction innermost ----
    intra = pl.pallas_call(
        functools.partial(_intra_kernel, num_class=C, inv_t=inv_t),
        out_shape=jax.ShapeDtypeStruct((R, 1, 1), jnp.float32),
        grid=(R, C),
        in_specs=[
            pl.BlockSpec((1, tile_n, d_pad), lambda r, c: (c, r, 0)),
            pl.BlockSpec((1, d_pad, n_pad), lambda r, c: (c, 0, 0)),
            pl.BlockSpec((1, 1, n_pad), lambda r, c: (c, 0, 0)),
            pl.BlockSpec((1, tile_n, 1), lambda r, c: (c, r, 0)),
        ],
        out_specs=pl.BlockSpec((1, 1, 1), lambda r, c: (r, 0, 0)),
        scratch_shapes=[pltpu.VMEM((tile_n, n_pad), jnp.float32),
                        pltpu.VMEM((tile_n, n_pad), jnp.float32),
                        pltpu.VMEM((1, 1), jnp.float32)],
        compiler_params=pltpu.CompilerParams(
            dimension_semantics=("parallel", "arbitrary"),
            vmem_limit_bytes=vmem_limit),
    )(x3, yt3, cmask3, rlab3)

    # Tiny scalar combine (log_prob = logits_intra[M, N] - denom[M, 1], summed).
    sum_denom = jnp.sum(denom)
    sum_log_prob = jnp.sum(intra) - jnp.float32(N) * sum_denom
    mean_log_prob_pos = sum_log_prob / mask_sum
    loss = -(temperature / base_temperature) * mean_log_prob_pos
    return loss / B


def _reference_loss(features, labels, temperature=0.2, base_temperature=0.2,
                    round_features_to_bf16=False):
    """Literal JAX translation of the PyTorch forward (correctness oracle)."""
    hp = lax.Precision.HIGHEST
    lab = labels.astype(jnp.float32)
    f = features.astype(jnp.float32)
    f = f * lax.rsqrt(jnp.maximum(jnp.sum(f * f, axis=-1, keepdims=True), 1e-24))
    if round_features_to_bf16:
        f = f.astype(jnp.bfloat16).astype(jnp.float32)
    B, V, C, D = f.shape
    N = B * V
    cf = jnp.concatenate([f[:, v] for v in range(V)], axis=0)        # [N, C, D]
    adci = jnp.einsum('icd,jcd->cij', cf, cf, precision=hp) / temperature
    lm = jnp.max(jnp.transpose(adci, (1, 2, 0)), axis=-1, keepdims=True)
    adci = jnp.transpose(jnp.transpose(adci, (1, 2, 0)) - lm, (2, 0, 1))
    lT = lab.T
    mask_intra = jnp.tile(lT[:, :, None] * lT[:, None, :], (1, V, V))
    all_mask = jnp.tile(lab.reshape(-1, 1) * lab.reshape(1, -1), (V, V))
    mask_intra = mask_intra * (1.0 - jnp.eye(N))[None]
    logits_intra = mask_intra * adci
    allf = cf.reshape(-1, D)
    aadc = (jnp.matmul(allf, allf.T, precision=hp) / temperature).reshape(N, C, N, C)
    logits_all = (aadc - jnp.max(aadc, axis=-2, keepdims=True)).reshape(N * C, N * C)
    all_mask = all_mask * (1.0 - jnp.eye(N * C))
    la = jnp.sum(jnp.exp(logits_all) * all_mask, axis=1, keepdims=True)
    la = jnp.where(la <= 0, 1.0, la)
    la = all_mask * jnp.log(la)
    li = jnp.transpose(mask_intra * logits_intra, (1, 0, 2)).reshape(N * C, N)
    log_prob = li - jnp.sum(la, axis=1, keepdims=True)
    mean_log_prob_pos = jnp.sum(log_prob) / jnp.sum(mask_intra)
    loss = -(temperature / base_temperature) * mean_log_prob_pos
    return loss / B


if __name__ == "__main__":
    key = jax.random.PRNGKey(0)
    B, V, C, D = 2, 2, 4, 32          # batch, views (contrast_count), num_class, feat_dim
    features = jax.random.normal(key, (B, V, C, D), dtype=jnp.float32)
    labels = jnp.array([[1.0, 0.0, 1.0, 0.0],
                        [0.0, 1.0, 1.0, 0.0]], dtype=jnp.float32)

    loss = multi_supcon_loss(features, labels)
    loss = jax.block_until_ready(loss)

    # Oracle fed the same bf16-rounded (f32-normalized) features the kernel gives the
    # MXU, so this check isolates kernel logic from bf16 operand rounding; a looser
    # check against the pure-f32 oracle guards overall fidelity.
    ref_bf16 = _reference_loss(features, labels, round_features_to_bf16=True)
    ref_f32 = _reference_loss(features, labels, round_features_to_bf16=False)

    assert bool(jnp.isfinite(loss)), "kernel produced non-finite loss"
    assert bool(jnp.allclose(loss, ref_bf16, rtol=2e-2, atol=2e-2)), \
        f"mismatch vs bf16-consistent reference: kernel={float(loss)} ref={float(ref_bf16)}"
    assert bool(jnp.allclose(loss, ref_f32, rtol=1.5e-1, atol=1e-1)), \
        f"mismatch vs f32 reference: kernel={float(loss)} ref={float(ref_f32)}"
    print("KERNEL_OK")
</pallas_src>

<mosaic_0001>
module attributes {stable_mosaic.version = 11 : i64} {
  func.func @_all_branch_kernel(%arg0: i32, %arg1: i32, %arg2: i32, %arg3: memref<1x128x128xbf16, #tpu.memory_space<vmem>>, %arg4: memref<1x128x128xbf16, #tpu.memory_space<vmem>>, %arg5: memref<1x128xf32, #tpu.memory_space<vmem>>, %arg6: memref<1x1x128xf32, #tpu.memory_space<vmem>>, %arg7: memref<1x128x1xf32, #tpu.memory_space<vmem>>, %arg8: memref<1x128x1xf32, #tpu.memory_space<vmem>>, %arg9: memref<1x1x1x1xf32, #tpu.memory_space<vmem>>, %arg10: memref<128x1xf32, #tpu.memory_space<vmem>>) attributes {dimension_semantics = [#tpu.dimension_semantics<parallel>, #tpu.dimension_semantics<parallel>, #tpu.dimension_semantics<arbitrary>], iteration_bounds = array<i64: 4, 1, 4>, scalar_prefetch = 0 : i64, scratch_operands = 1 : i64, tpu.core_type = #tpu.core_type<tc>, window_params = [{transform_indices = @transform_0, window_bounds = array<i64: 1, 128, 128>}, {transform_indices = @transform_1, window_bounds = array<i64: 1, 128, 128>}, {pipeline_mode = #tpu.pipeline_mode<synchronous>, transform_indices = @transform_2, window_bounds = array<i64: 1, 128>}, {transform_indices = @transform_3, window_bounds = array<i64: 1, 1, 128>}, {transform_indices = @transform_4, window_bounds = array<i64: 1, 128, 1>}, {transform_indices = @transform_5, window_bounds = array<i64: 1, 128, 1>}, {transform_indices = @transform_6, window_bounds = array<i64: 1, 1, 1, 1>}]} {
    %c0 = arith.constant 0 : index
    %c0_0 = arith.constant 0 : index
    %c0_1 = arith.constant 0 : index
    %0 = vector.load %arg3[%c0, %c0_0, %c0_1] : memref<1x128x128xbf16, #tpu.memory_space<vmem>>, vector<1x128x128xbf16>
    %1 = vector.shape_cast %0 : vector<1x128x128xbf16> to vector<128x128xbf16>
    %c0_2 = arith.constant 0 : index
    %c0_3 = arith.constant 0 : index
    %c0_4 = arith.constant 0 : index
    %2 = vector.load %arg4[%c0_2, %c0_3, %c0_4] : memref<1x128x128xbf16, #tpu.memory_space<vmem>>, vector<1x128x128xbf16>
    %3 = vector.shape_cast %2 : vector<1x128x128xbf16> to vector<128x128xbf16>
    %cst = arith.constant dense<0.000000e+00> : vector<128x128xf32>
    %4 = tpu.matmul %1, %3, %cst {dimension_numbers = #tpu.dot_dimension_numbers<[1], [0], [0], [1], [0, 0, 1, 1], [], []>} : vector<128x128xbf16>, vector<128x128xbf16>, vector<128x128xf32> -> vector<128x128xf32>
    %cst_5 = arith.constant 5.000000e+00 : f32
    %5 = vector.broadcast %cst_5 : f32 to vector<128x128xf32>
    %6 = arith.mulf %4, %5 : vector<128x128xf32>
    %c0_6 = arith.constant 0 : index
    %c0_7 = arith.constant 0 : index
    %7 = vector.load %arg5[%c0_6, %c0_7] : memref<1x128xf32, #tpu.memory_space<vmem>>, vector<1x128xf32>
    %8 = vector.broadcast %7 : vector<1x128xf32> to vector<128x128xf32>
    %9 = arith.addf %6, %8 : vector<128x128xf32>
    %cst_8 = arith.constant dense<0xFF800000> : vector<128xf32>
    %10 = vector.multi_reduction <maximumf>, %9, %cst_8 [1] : vector<128x128xf32> to vector<128xf32>
    %11 = vector.shape_cast %10 : vector<128xf32> to vector<128x1xf32>
    %12 = vector.broadcast %11 : vector<128x1xf32> to vector<128x128xf32>
    %13 = arith.subf %6, %12 : vector<128x128xf32>
    %14 = math.exp %13 : vector<128x128xf32>
    %c0_9 = arith.constant 0 : index
    %c0_10 = arith.constant 0 : index
    %c0_11 = arith.constant 0 : index
    %15 = vector.load %arg6[%c0_9, %c0_10, %c0_11] : memref<1x1x128xf32, #tpu.memory_space<vmem>>, vector<1x1x128xf32>
    %16 = vector.shape_cast %15 : vector<1x1x128xf32> to vector<1x128xf32>
    %17 = vector.broadcast %16 : vector<1x128xf32> to vector<128x128xf32>
    %18 = arith.mulf %14, %17 : vector<128x128xf32>
    %cst_12 = arith.constant dense<0.000000e+00> : vector<128xf32>
    %19 = vector.multi_reduction <add>, %18, %cst_12 [1] : vector<128x128xf32> to vector<128xf32>
    %20 = vector.shape_cast %19 : vector<128xf32> to vector<128x1xf32>
    %c0_i32 = arith.constant 0 : i32
    %21 = arith.cmpi eq, %arg2, %c0_i32 : i32
    %22 = arith.extui %21 : i1 to i32
    %c0_i32_13 = arith.constant 0 : i32
    %23 = arith.cmpi ne, %22, %c0_i32_13 : i32
    scf.if %23 {
      %cst_20 = arith.constant 0.000000e+00 : f32
      %33 = vector.broadcast %cst_20 : f32 to vector<128x1xf32>
      %c0_21 = arith.constant 0 : index
      %c0_22 = arith.constant 0 : index
      %34 = vector.load %arg10[%c0_21, %c0_22] : memref<128x1xf32, #tpu.memory_space<vmem>>, vector<128x1xf32>
      tpu.vector_store %arg10[%c0_21, %c0_22], %33 {strides = array<i32>} : memref<128x1xf32, #tpu.memory_space<vmem>>, vector<128x1xf32>,
    } else {
    }
    %c0_14 = arith.constant 0 : index
    %c0_15 = arith.constant 0 : index
    %24 = vector.load %arg10[%c0_14, %c0_15] : memref<128x1xf32, #tpu.memory_space<vmem>>, vector<128x1xf32>
    %25 = arith.addf %24, %20 : vector<128x1xf32>
    %c0_16 = arith.constant 0 : index
    %c0_17 = arith.constant 0 : index
    %26 = vector.load %arg10[%c0_16, %c0_17] : memref<128x1xf32, #tpu.memory_space<vmem>>, vector<128x1xf32>
    tpu.vector_store %arg10[%c0_16, %c0_17], %25 {strides = array<i32>} : memref<128x1xf32, #tpu.memory_space<vmem>>, vector<128x1xf32>,
    %27 = arith.cmpi eq, %arg0, %arg2 : i32
    %28 = arith.extui %27 : i1 to i32
    %c0_i32_18 = arith.constant 0 : i32
    %29 = arith.cmpi ne, %28, %c0_i32_18 : i32
    scf.if %29 {
      %33 = tpu.iota {dimensions = array<i32: 0>} : vector<128x128xi32>
      %c128_i32 = arith.constant 128 : i32
      %34 = arith.muli %arg1, %c128_i32 : i32
      %35 = vector.broadcast %34 : i32 to vector<128x128xi32>
      %36 = arith.addi %33, %35 : vector<128x128xi32>
      %37 = tpu.iota {dimensions = array<i32: 1>} : vector<128x128xi32>
      %38 = arith.cmpi eq, %36, %37 : vector<128x128xi32>
      %39 = arith.extui %38 : vector<128x128xi1> to vector<128x128xi32>
      %40 = arith.sitofp %39 : vector<128x128xi32> to vector<128x128xf32>
      %c0_20 = arith.constant 0 : index
      %c0_21 = arith.constant 0 : index
      %41 = vector.load %arg10[%c0_20, %c0_21] : memref<128x1xf32, #tpu.memory_space<vmem>>, vector<128x1xf32>
      %42 = arith.mulf %18, %40 : vector<128x128xf32>
      %cst_22 = arith.constant dense<0.000000e+00> : vector<128xf32>
      %43 = vector.multi_reduction <add>, %42, %cst_22 [1] : vector<128x128xf32> to vector<128xf32>
      %44 = vector.shape_cast %43 : vector<128xf32> to vector<128x1xf32>
      %45 = arith.subf %41, %44 : vector<128x1xf32>
      %c0_23 = arith.constant 0 : index
      %c0_24 = arith.constant 0 : index
      %46 = vector.load %arg10[%c0_23, %c0_24] : memref<128x1xf32, #tpu.memory_space<vmem>>, vector<128x1xf32>
      tpu.vector_store %arg10[%c0_23, %c0_24], %45 {strides = array<i32>} : memref<128x1xf32, #tpu.memory_space<vmem>>, vector<128x1xf32>,
    } else {
    }
    %c3_i32 = arith.constant 3 : i32
    %30 = arith.cmpi eq, %arg2, %c3_i32 : i32
    %31 = arith.extui %30 : i1 to i32
    %c0_i32_19 = arith.constant 0 : i32
    %32 = arith.cmpi ne, %31, %c0_i32_19 : i32
    scf.if %32 {
      %c0_20 = arith.constant 0 : index
      %c0_21 = arith.constant 0 : index
      %c0_22 = arith.constant 0 : index
      %33 = vector.load %arg7[%c0_20, %c0_21, %c0_22] : memref<1x128x1xf32, #tpu.memory_space<vmem>>, vector<1x128x1xf32>
      %34 = vector.shape_cast %33 : vector<1x128x1xf32> to vector<128x1xf32>
      %c0_23 = arith.constant 0 : index
      %c0_24 = arith.constant 0 : index
      %35 = vector.load %arg10[%c0_23, %c0_24] : memref<128x1xf32, #tpu.memory_space<vmem>>, vector<128x1xf32>
      %36 = arith.mulf %34, %35 : vector<128x1xf32>
      %cst_25 = arith.constant 0.000000e+00 : f32
      %37 = vector.broadcast %cst_25 : f32 to vector<128x1xf32>
      %38 = arith.cmpf ole, %36, %37 : vector<128x1xf32>
      %cst_26 = arith.constant 1.000000e+00 : f32
      %39 = vector.broadcast %cst_26 : f32 to vector<128x1xf32>
      %40 = arith.select %38, %39, %36 : vector<128x1xi1>, vector<128x1xf32>
      %41 = math.log %40 : vector<128x1xf32>
      %c0_27 = arith.constant 0 : index
      %c0_28 = arith.constant 0 : index
      %c0_29 = arith.constant 0 : index
      %42 = vector.load %arg8[%c0_27, %c0_28, %c0_29] : memref<1x128x1xf32, #tpu.memory_space<vmem>>, vector<1x128x1xf32>
      %43 = vector.shape_cast %42 : vector<1x128x1xf32> to vector<128x1xf32>
      %44 = arith.mulf %41, %43 : vector<128x1xf32>
      %45 = vector.shape_cast %44 : vector<128x1xf32> to vector<1x128x1xf32>
      %cst_30 = arith.constant dense<0.000000e+00> : vector<1xf32>
      %46 = vector.multi_reduction <add>, %45, %cst_30 [1, 2] : vector<1x128x1xf32> to vector<1xf32>
      %47 = vector.shape_cast %46 : vector<1xf32> to vector<1x1x1xf32>
      %48 = vector.extract %47[0, 0, 0] : f32 from vector<1x1x1xf32>
      %49 = vector.broadcast %48 : f32 to vector<1x1xf32>
      %c0_31 = arith.constant 0 : index
      %c0_32 = arith.constant 0 : index
      %c0_33 = arith.constant 0 : index
      %c0_34 = arith.constant 0 : index
      %50 = vector.load %arg9[%c0_31, %c0_32, %c0_33, %c0_34] : memref<1x1x1x1xf32, #tpu.memory_space<vmem>>, vector<1x1x1x1xf32>
      %51 = vector.shape_cast %50 : vector<1x1x1x1xf32> to vector<1x1xf32>
      %52 = vector.shape_cast %49 : vector<1x1xf32> to vector<1x1x1x1xf32>
      tpu.vector_store %arg9[%c0_31, %c0_32, %c0_33, %c0_34], %52 {strides = array<i32>} : memref<1x1x1x1xf32, #tpu.memory_space<vmem>>, vector<1x1x1x1xf32>,
    } else {
    }
    return
  }
  func.func @transform_0(%arg0: i32, %arg1: i32, %arg2: i32) -> (i32, i32, i32) {
    %c0_i32 = arith.constant 0 : i32
    %c0_i32_0 = arith.constant 0 : i32
    return %arg0, %arg1, %c0_i32 : i32, i32, i32
  }
  func.func @transform_1(%arg0: i32, %arg1: i32, %arg2: i32) -> (i32, i32, i32) {
    %c0_i32 = arith.constant 0 : i32
    %c0_i32_0 = arith.constant 0 : i32
    %c0_i32_1 = arith.constant 0 : i32
    return %arg2, %c0_i32, %c0_i32_0 : i32, i32, i32
  }
  func.func @transform_2(%arg0: i32, %arg1: i32, %arg2: i32) -> (i32, i32) {
    %c0_i32 = arith.constant 0 : i32
    %c0_i32_0 = arith.constant 0 : i32
    %c0_i32_1 = arith.constant 0 : i32
    return %c0_i32, %c0_i32_0 : i32, i32
  }
  func.func @transform_3(%arg0: i32, %arg1: i32, %arg2: i32) -> (i32, i32, i32) {
    %c0_i32 = arith.constant 0 : i32
    %c0_i32_0 = arith.constant 0 : i32
    %c0_i32_1 = arith.constant 0 : i32
    return %arg2, %c0_i32, %c0_i32_0 : i32, i32, i32
  }
  func.func @transform_4(%arg0: i32, %arg1: i32, %arg2: i32) -> (i32, i32, i32) {
    %c0_i32 = arith.constant 0 : i32
    %c0_i32_0 = arith.constant 0 : i32
    return %arg0, %arg1, %c0_i32 : i32, i32, i32
  }
  func.func @transform_5(%arg0: i32, %arg1: i32, %arg2: i32) -> (i32, i32, i32) {
    %c0_i32 = arith.constant 0 : i32
    %c0_i32_0 = arith.constant 0 : i32
    return %arg0, %arg1, %c0_i32 : i32, i32, i32
  }
  func.func @transform_6(%arg0: i32, %arg1: i32, %arg2: i32) -> (i32, i32, i32, i32) {
    %c0_i32 = arith.constant 0 : i32
    %c0_i32_0 = arith.constant 0 : i32
    %c0_i32_1 = arith.constant 0 : i32
    return %arg0, %arg1, %c0_i32, %c0_i32_0 : i32, i32, i32, i32
  }
}

</mosaic_0001>

<llo_original>
// kernel: tpu_custom_call.1
$region0: #{tpu_custom_call.1}
  #allocation0 [shape = 'u32[]', space=smem, size = 0x4, offset = 0x4, fixed_abs, tag = 'smem constant byte address 0x4 - core index']
  #allocation1 [shape = 'u32[144,128]{1,0:T(1,128)}', space=vmem, size = 0x12000, scoped, tag = 'internal scratch']
  #allocation2 [shape = 'f32[128,1]{1,0:T(8,128)}', space=vmem, size = 0x10000, scoped, tag = 'scratch operand']
  %s0 = inlined_call_operand.vmem [shape: bf16[4,128,128], index: 0, kind: input, shape index: {}]
  %s1 = inlined_call_operand.vmem [shape: bf16[4,128,128], index: 1, kind: input, shape index: {}]
  %s2 = inlined_call_operand.vmem [shape: f32[1,128], index: 2, kind: input, shape index: {}]
  %s3 = inlined_call_operand.vmem [shape: f32[4,1,128], index: 3, kind: input, shape index: {}]
  %s4 = inlined_call_operand.vmem [shape: f32[4,128,1], index: 4, kind: input, shape index: {}]
  %s5 = inlined_call_operand.vmem [shape: f32[4,128,1], index: 5, kind: input, shape index: {}]
  %s6 = inlined_call_operand.vmem [shape: f32[4,1,1,1], index: 6, kind: output, shape index: {}]
  %s7 = sld [smem:[#allocation0]]
  $region69: #{tpu_custom_call.1} parent=0
    _
  %s9 = ssub.s32 1, %s7
  %s10 = scalar_select 0, %s9, %s7
  loop: start=0, step=1, limit=18
  $region2: #{tpu_custom_call.1} parent=0 // loop_pre_header
    _
  $region3: #{tpu_custom_call.1} parent=0 // loop_header
    %s12 = sphi 0, %s16
    %p13 = scmp.ge.s32.totalorder %s12, 18
    %s19 = sphi 0, %s38
    %s20 = sphi 0, %s34
    %s21 = sphi 0, %s30
    %s22 = sphi 0, %s19
    %s23 = sphi 0, %s20
    %s24 = sphi 0, %s21
    %s25 = sphi 0, %s22
    %s26 = sphi 0, %s23
    %s27 = sphi 0, %s24
    %s43 = sphi 0, %s45
    %s46 = sphi 0, %s43
    %s47 = sphi 0, %s46
    %s63 = sphi 0, %s47
    %s69 = sphi 0, %s71
    %s72 = sphi 0, %s69
    %s73 = sphi 0, %s72
    %s89 = sphi 0, %s73
    %s93 = sphi 0, %s93
    %s95 = sphi 0, %s93
    %s96 = sphi 0, %s95
    %s110 = sphi 0, %s96
    %s116 = sphi 0, %s118
    %s119 = sphi 0, %s116
    %s120 = sphi 0, %s119
    %s136 = sphi 0, %s120
    %s144 = sphi 0, %s146
    %s147 = sphi 0, %s144
    %s148 = sphi 0, %s147
    %s164 = sphi 0, %s148
    %s172 = sphi 0, %s174
    %s175 = sphi 0, %s172
    %s176 = sphi 0, %s175
    %s192 = sphi 0, %s176
    %s200 = sphi 0, %s202
    %s203 = sphi 0, %s200
    %s204 = sphi 0, %s203
    %s220 = sphi 0, %s204
  $region4: #{tpu_custom_call.1} parent=0 // loop_header_branch
    %15 = sbr.rel (%p13) target = $region8
  $region5: #{tpu_custom_call.1} parent=0 // loop_body
    %s17 = ssub.s32 %s12, 1
    %s18 = ssub.s32 %s12, 2
    %s28 = sadd.s32 1, %s21
    %p29 = scmp.ge.s32.totalorder %s28, 4
    %s30 = scalar_select %p29, 0, %s28
    %s31 = sadd.s32 1, %s20
    %s32 = scalar_select %p29, %s31, %s20
    %p33 = scmp.ge.s32.totalorder %s32, 1
    %s34 = scalar_select %p33, 0, %s32
    %s35 = sadd.s32 1, %s19
    %s36 = scalar_select %p33, %s35, %s19
    %p37 = scmp.ge.s32.totalorder %s36, 4
    %s38 = scalar_select %p37, 0, %s36
    %s39 = ssub.s32 %s19, %s38
    %s40 = ssub.s32 %s20, %s34
    %s41 = sor.u32 %s39, %s40
    %p42 = scmp.eq.s32.totalorder %s41, 0
    %s44 = sadd.s32 %s43, 1
    %s45 = scalar_select %p42, %s43, %s44
    %p48 = pneg %p42
    %p49 = scmp.eq.s32.totalorder %s12, 15
    %p50 = por %p48, %p49
    %p51 = scmp.ne.s32.totalorder %s43, %s46
    %p52 = scmp.eq.s32.totalorder %s12, 0
    %p53 = por %p51, %p52
    %p54 = scmp.ne.s32.totalorder %s43, %s46
    %p55 = scmp.eq.s32.totalorder %s17, 15
    %p56 = por %p54, %p55
    %p57 = scmp.ne.s32.totalorder %s46, %s47
    %p58 = scmp.eq.s32.totalorder %s17, 0
    %p59 = por %p57, %p58
    %p60 = scmp.ne.s32.totalorder %s46, %s47
    %p61 = scmp.eq.s32.totalorder %s18, 15
    %p62 = por %p60, %p61
    %p64 = scmp.ne.s32.totalorder %s47, %s63
    %p65 = scmp.eq.s32.totalorder %s18, 0
    %p66 = por %p64, %p65
    %s67 = ssub.s32 %s21, %s30
    %p68 = scmp.eq.s32.totalorder %s67, 0
    %s70 = sadd.s32 %s69, 1
    %s71 = scalar_select %p68, %s69, %s70
    %p74 = pneg %p68
    %p75 = scmp.eq.s32.totalorder %s12, 15
    %p76 = por %p74, %p75
    %p77 = scmp.ne.s32.totalorder %s69, %s72
    %p78 = scmp.eq.s32.totalorder %s12, 0
    %p79 = por %p77, %p78
    %p80 = scmp.ne.s32.totalorder %s69, %s72
    %p81 = scmp.eq.s32.totalorder %s17, 15
    %p82 = por %p80, %p81
    %p83 = scmp.ne.s32.totalorder %s72, %s73
    %p84 = scmp.eq.s32.totalorder %s17, 0
    %p85 = por %p83, %p84
    %p86 = scmp.ne.s32.totalorder %s72, %s73
    %p87 = scmp.eq.s32.totalorder %s18, 15
    %p88 = por %p86, %p87
    %p90 = scmp.ne.s32.totalorder %s73, %s89
    %p91 = scmp.eq.s32.totalorder %s18, 0
    %p92 = por %p90, %p91
    %s94 = sadd.s32 %s93, 1
    %p97 = scmp.eq.s32.totalorder %s12, 15
    %p98 = scmp.ne.s32.totalorder %s93, %s95
    %p99 = scmp.eq.s32.totalorder %s12, 0
    %p100 = por %p98, %p99
    %p101 = scmp.ne.s32.totalorder %s93, %s95
    %p102 = scmp.eq.s32.totalorder %s17, 15
    %p103 = por %p101, %p102
    %p104 = scmp.ne.s32.totalorder %s95, %s96
    %p105 = scmp.eq.s32.totalorder %s17, 0
    %p106 = por %p104, %p105
    %p107 = scmp.ne.s32.totalorder %s95, %s96
    %p108 = scmp.eq.s32.totalorder %s18, 15
    %p109 = por %p107, %p108
    %p111 = scmp.ne.s32.totalorder %s96, %s110
    %p112 = scmp.eq.s32.totalorder %s18, 0
    %p113 = por %p111, %p112
    %s114 = ssub.s32 %s21, %s30
    %p115 = scmp.eq.s32.totalorder %s114, 0
    %s117 = sadd.s32 %s116, 1
    %s118 = scalar_select %p115, %s116, %s117
    %p121 = pneg %p115
    %p122 = scmp.eq.s32.totalorder %s12, 15
    %p123 = por %p121, %p122
    %p124 = scmp.ne.s32.totalorder %s116, %s119
    %p125 = scmp.eq.s32.totalorder %s12, 0
    %p126 = por %p124, %p125
    %p127 = scmp.ne.s32.totalorder %s116, %s119
    %p128 = scmp.eq.s32.totalorder %s17, 15
    %p129 = por %p127, %p128
    %p130 = scmp.ne.s32.totalorder %s119, %s120
    %p131 = scmp.eq.s32.totalorder %s17, 0
    %p132 = por %p130, %p131
    %p133 = scmp.ne.s32.totalorder %s119, %s120
    %p134 = scmp.eq.s32.totalorder %s18, 15
    %p135 = por %p133, %p134
    %p137 = scmp.ne.s32.totalorder %s120, %s136
    %p138 = scmp.eq.s32.totalorder %s18, 0
    %p139 = por %p137, %p138
    %s140 = ssub.s32 %s19, %s38
    %s141 = ssub.s32 %s20, %s34
    %s142 = sor.u32 %s140, %s141
    %p143 = scmp.eq.s32.totalorder %s142, 0
    %s145 = sadd.s32 %s144, 1
    %s146 = scalar_select %p143, %s144, %s145
    %p149 = pneg %p143
    %p150 = scmp.eq.s32.totalorder %s12, 15
    %p151 = por %p149, %p150
    %p152 = scmp.ne.s32.totalorder %s144, %s147
    %p153 = scmp.eq.s32.totalorder %s12, 0
    %p154 = por %p152, %p153
    %p155 = scmp.ne.s32.totalorder %s144, %s147
    %p156 = scmp.eq.s32.totalorder %s17, 15
    %p157 = por %p155, %p156
    %p158 = scmp.ne.s32.totalorder %s147, %s148
    %p159 = scmp.eq.s32.totalorder %s17, 0
    %p160 = por %p158, %p159
    %p161 = scmp.ne.s32.totalorder %s147, %s148
    %p162 = scmp.eq.s32.totalorder %s18, 15
    %p163 = por %p161, %p162
    %p165 = scmp.ne.s32.totalorder %s148, %s164
    %p166 = scmp.eq.s32.totalorder %s18, 0
    %p167 = por %p165, %p166
    %s168 = ssub.s32 %s19, %s38
    %s169 = ssub.s32 %s20, %s34
    %s170 = sor.u32 %s168, %s169
    %p171 = scmp.eq.s32.totalorder %s170, 0
    %s173 = sadd.s32 %s172, 1
    %s174 = scalar_select %p171, %s172, %s173
    %p177 = pneg %p171
    %p178 = scmp.eq.s32.totalorder %s12, 15
    %p179 = por %p177, %p178
    %p180 = scmp.ne.s32.totalorder %s172, %s175
    %p181 = scmp.eq.s32.totalorder %s12, 0
    %p182 = por %p180, %p181
    %p183 = scmp.ne.s32.totalorder %s172, %s175
    %p184 = scmp.eq.s32.totalorder %s17, 15
    %p185 = por %p183, %p184
    %p186 = scmp.ne.s32.totalorder %s175, %s176
    %p187 = scmp.eq.s32.totalorder %s17, 0
    %p188 = por %p186, %p187
    %p189 = scmp.ne.s32.totalorder %s175, %s176
    %p190 = scmp.eq.s32.totalorder %s18, 15
    %p191 = por %p189, %p190
    %p193 = scmp.ne.s32.totalorder %s176, %s192
    %p194 = scmp.eq.s32.totalorder %s18, 0
    %p195 = por %p193, %p194
    %s196 = ssub.s32 %s19, %s38
    %s197 = ssub.s32 %s20, %s34
    %s198 = sor.u32 %s196, %s197
    %p199 = scmp.eq.s32.totalorder %s198, 0
    %s201 = sadd.s32 %s200, 1
    %s202 = scalar_select %p199, %s200, %s201
    %p205 = pneg %p199
    %p206 = scmp.eq.s32.totalorder %s12, 15
    %p207 = por %p205, %p206
    %p208 = scmp.ne.s32.totalorder %s200, %s203
    %p209 = scmp.eq.s32.totalorder %s12, 0
    %p210 = por %p208, %p209
    %p211 = scmp.ne.s32.totalorder %s200, %s203
    %p212 = scmp.eq.s32.totalorder %s17, 15
    %p213 = por %p211, %p212
    %p214 = scmp.ne.s32.totalorder %s203, %s204
    %p215 = scmp.eq.s32.totalorder %s17, 0
    %p216 = por %p214, %p215
    %p217 = scmp.ne.s32.totalorder %s203, %s204
    %p218 = scmp.eq.s32.totalorder %s18, 15
    %p219 = por %p217, %p218
    %p221 = scmp.ne.s32.totalorder %s204, %s220
    %p222 = scmp.eq.s32.totalorder %s18, 0
    %p223 = por %p221, %p222
    %p224 = scmp.le.s32.totalorder 1, %s12
    %p225 = scmp.lt.s32.totalorder %s12, 17
    %p226 = pnand %p224, %p225
    %p227 = pneg %p226
    // Predicated region
    $region9: #{tpu_custom_call.1} parent=5 // pred_check
      _
    $region10: #{tpu_custom_call.1} parent=5 // pred_check_branch
      %229 = sbr.rel (%p226) target = $region12
    $region11: #{tpu_custom_call.1} parent=5 // pred_region
      %s230 = ssub.s32 %s12, 1
      // Predicated region
      $region13: #{tpu_custom_call.1} parent=11 // pred_check
        %p231 = pneg %p106
      $region14: #{tpu_custom_call.1} parent=11 // pred_check_branch
        %233 = sbr.rel (%p231) target = $region16
      $region15: #{tpu_custom_call.1} parent=11 // pred_region
        _
      $region16: #{tpu_custom_call.1} parent=11 // pred_fallthru
        _
    $region12: #{tpu_custom_call.1} parent=5 // pred_fallthru
      _
    %p234 = scmp.lt.s32.totalorder %s12, 16
    // Predicated region
    $region17: #{tpu_custom_call.1} parent=5 // pred_check
      %p235 = pneg %p234
    $region18: #{tpu_custom_call.1} parent=5 // pred_check_branch
      %237 = sbr.rel (%p235) target = $region20
    $region19: #{tpu_custom_call.1} parent=5 // pred_region
      // Predicated region
      $region21: #{tpu_custom_call.1} parent=19 // pred_check
        %p238 = pneg %p53
      $region22: #{tpu_custom_call.1} parent=19 // pred_check_branch
        %240 = sbr.rel (%p238) target = $region24
      $region23: #{tpu_custom_call.1} parent=19 // pred_region
        %s241 = smul.u32 16, %s20
        %p242 = scmp.lt.s32.totalorder %s19, 3
        %s243 = scalar_select %p242, %s19, 3
        %p244 = scmp.lt.s32.totalorder %s241, 15
        %s245 = scalar_select %p244, %s241, 15
        %s246 = smul.addr %s243, 16
        %s247 = sadd.s32 %s245, %s246
        %s248 = smul.addr %s247, 4
        %s249 = scalar_lea.vmem %s0, %s248
        %s250 = smul.u32 16, %s20
      $region24: #{tpu_custom_call.1} parent=19 // pred_fallthru
        _
      // Predicated region
      $region25: #{tpu_custom_call.1} parent=19 // pred_check
        %p251 = pneg %p79
      $region26: #{tpu_custom_call.1} parent=19 // pred_check_branch
        %253 = sbr.rel (%p251) target = $region28
      $region27: #{tpu_custom_call.1} parent=19 // pred_region
        %p254 = scmp.lt.s32.totalorder %s21, 3
        %s255 = scalar_select %p254, %s21, 3
        %s256 = smul.addr %s255, 16
        %s257 = smul.addr %s256, 4
        %s258 = scalar_lea.vmem %s1, %s257
      $region28: #{tpu_custom_call.1} parent=19 // pred_fallthru
        _
      // Predicated region
      $region29: #{tpu_custom_call.1} parent=19 // pred_check
        %p259 = pneg %p126
      $region30: #{tpu_custom_call.1} parent=19 // pred_check_branch
        %261 = sbr.rel (%p259) target = $region32
      $region31: #{tpu_custom_call.1} parent=19 // pred_region
        %p262 = scmp.lt.s32.totalorder %s21, 3
        %s263 = scalar_select %p262, %s21, 3
        %s264 = scalar_lea.vmem %s3, %s263
      $region32: #{tpu_custom_call.1} parent=19 // pred_fallthru
        _
      // Predicated region
      $region33: #{tpu_custom_call.1} parent=19 // pred_check
        %p265 = pneg %p154
      $region34: #{tpu_custom_call.1} parent=19 // pred_check_branch
        %267 = sbr.rel (%p265) target = $region36
      $region35: #{tpu_custom_call.1} parent=19 // pred_region
        %s268 = smul.u32 16, %s20
        %p269 = scmp.lt.s32.totalorder %s19, 3
        %s270 = scalar_select %p269, %s19, 3
        %p271 = scmp.lt.s32.totalorder %s268, 15
        %s272 = scalar_select %p271, %s268, 15
        %s273 = smul.addr %s270, 16
        %s274 = sadd.s32 %s272, %s273
        %s275 = smul.addr %s274, 8
        %s276 = scalar_lea.vmem %s4, %s275
        %s277 = smul.u32 16, %s20
      $region36: #{tpu_custom_call.1} parent=19 // pred_fallthru
        _
      // Predicated region
      $region37: #{tpu_custom_call.1} parent=19 // pred_check
        %p278 = pneg %p182
      $region38: #{tpu_custom_call.1} parent=19 // pred_check_branch
        %280 = sbr.rel (%p278) target = $region40
      $region39: #{tpu_custom_call.1} parent=19 // pred_region
        %s281 = smul.u32 16, %s20
        %p282 = scmp.lt.s32.totalorder %s19, 3
        %s283 = scalar_select %p282, %s19, 3
        %p284 = scmp.lt.s32.totalorder %s281, 15
        %s285 = scalar_select %p284, %s281, 15
        %s286 = smul.addr %s283, 16
        %s287 = sadd.s32 %s285, %s286
        %s288 = smul.addr %s287, 8
        %s289 = scalar_lea.vmem %s5, %s288
        %s290 = smul.u32 16, %s20
      $region40: #{tpu_custom_call.1} parent=19 // pred_fallthru
        _
    $region20: #{tpu_custom_call.1} parent=5 // pred_fallthru
      _
    %p291 = scmp.le.s32.totalorder 1, %s12
    %p292 = scmp.lt.s32.totalorder %s12, 17
    %p293 = pnand %p291, %p292
    %p294 = pneg %p293
    // Predicated region
    $region41: #{tpu_custom_call.1} parent=5 // pred_check
      _
    $region42: #{tpu_custom_call.1} parent=5 // pred_check_branch
      %296 = sbr.rel (%p293) target = $region44
    $region43: #{tpu_custom_call.1} parent=5 // pred_region
      %s297 = ssub.s32 %s12, 1
      %s298 = smul.u32 16, %s23
      %p299 = scmp.lt.s32.totalorder %s22, 3
      %s300 = scalar_select %p299, %s22, 3
      %p301 = scmp.lt.s32.totalorder %s298, 15
      %s302 = scalar_select %p301, %s298, 15
      %s303 = smul.addr %s300, 16
      %s304 = sadd.s32 %s302, %s303
      %s305 = smul.addr %s304, 4
      %s306 = scalar_lea.vmem %s0, %s305
      %p307 = pneg %p59
      %p308 = pneg %p56
      %p309 = scmp.lt.s32.totalorder %s24, 3
      %s310 = scalar_select %p309, %s24, 3
      %s311 = smul.addr %s310, 16
      %s312 = smul.addr %s311, 4
      %s313 = scalar_lea.vmem %s1, %s312
      %p314 = pneg %p85
      %p315 = pneg %p82
      %p316 = pneg %p106
      %p317 = pneg %p103
      %p318 = scmp.lt.s32.totalorder %s24, 3
      %s319 = scalar_select %p318, %s24, 3
      %s320 = scalar_lea.vmem %s3, %s319
      %p321 = pneg %p132
      %p322 = pneg %p129
      %s323 = smul.u32 16, %s23
      %p324 = scmp.lt.s32.totalorder %s22, 3
      %s325 = scalar_select %p324, %s22, 3
      %p326 = scmp.lt.s32.totalorder %s323, 15
      %s327 = scalar_select %p326, %s323, 15
      %s328 = smul.addr %s325, 16
      %s329 = sadd.s32 %s327, %s328
      %s330 = smul.addr %s329, 8
      %s331 = scalar_lea.vmem %s4, %s330
      %p332 = pneg %p160
      %p333 = pneg %p157
      %s334 = smul.u32 16, %s23
      %p335 = scmp.lt.s32.totalorder %s22, 3
      %s336 = scalar_select %p335, %s22, 3
      %p337 = scmp.lt.s32.totalorder %s334, 15
      %s338 = scalar_select %p337, %s334, 15
      %s339 = smul.addr %s336, 16
      %s340 = sadd.s32 %s338, %s339
      %s341 = smul.addr %s340, 8
      %s342 = scalar_lea.vmem %s5, %s341
      %p343 = pneg %p188
      %p344 = pneg %p185
      %p345 = pneg %p216
      %p346 = pneg %p213
      %p347 = scmp.lt.s32.totalorder %s22, 3
      %s348 = scalar_select %p347, %s22, 3
      %p349 = scmp.lt.s32.totalorder %s23, 0
      %s350 = scalar_select %p349, %s23, 0
      %s351 = sadd.s32 %s350, %s348
      %s352 = scalar_lea.vmem %s6, %s351
      %s353 = smul.u32 16, %s23
      %p354 = scmp.lt.s32.totalorder %s22, 3
      %s355 = scalar_select %p354, %s22, 3
      %p356 = scmp.lt.s32.totalorder %s353, 15
      %s357 = scalar_select %p356, %s353, 15
      %s358 = smul.addr %s355, 16
      %s359 = sadd.s32 %s357, %s358
      %s360 = smul.addr %s359, 4
      %s361 = scalar_lea.vmem %s0, %s360
      %s362 = smul.u32 16, %s23
      %p363 = scmp.lt.s32.totalorder %s24, 3
      %s364 = scalar_select %p363, %s24, 3
      %s365 = smul.addr %s364, 16
      %s366 = smul.addr %s365, 4
      %s367 = scalar_lea.vmem %s1, %s366
      %p368 = scmp.lt.s32.totalorder %s24, 3
      %s369 = scalar_select %p368, %s24, 3
      %s370 = scalar_lea.vmem %s3, %s369
      %s371 = smul.u32 16, %s23
      %p372 = scmp.lt.s32.totalorder %s22, 3
      %s373 = scalar_select %p372, %s22, 3
      %p374 = scmp.lt.s32.totalorder %s371, 15
      %s375 = scalar_select %p374, %s371, 15
      %s376 = smul.addr %s373, 16
      %s377 = sadd.s32 %s375, %s376
      %s378 = smul.addr %s377, 8
      %s379 = scalar_lea.vmem %s4, %s378
      %s380 = smul.u32 16, %s23
      %s381 = smul.u32 16, %s23
      %p382 = scmp.lt.s32.totalorder %s22, 3
      %s383 = scalar_select %p382, %s22, 3
      %p384 = scmp.lt.s32.totalorder %s381, 15
      %s385 = scalar_select %p384, %s381, 15
      %s386 = smul.addr %s383, 16
      %s387 = sadd.s32 %s385, %s386
      %s388 = smul.addr %s387, 8
      %s389 = scalar_lea.vmem %s5, %s388
      %s390 = smul.u32 16, %s23
      %p391 = scmp.lt.s32.totalorder %s22, 3
      %s392 = scalar_select %p391, %s22, 3
      %p393 = scmp.lt.s32.totalorder %s23, 0
      %s394 = scalar_select %p393, %s23, 0
      %s395 = sadd.s32 %s394, %s392
      %s396 = scalar_lea.vmem %s6, %s395
      %v398 = vld [vmem:[%s361] sm:$0xf]
      %v399 = vld [vmem:[%s361 + $0x4] sm:$0xf]
      %v400 = vld [vmem:[%s361 + $0x8] sm:$0xf]
      %v401 = vld [vmem:[%s361 + $0xc] sm:$0xf]
      %v402 = vld [vmem:[%s361 + $0x10] sm:$0xf]
      %v403 = vld [vmem:[%s361 + $0x14] sm:$0xf]
      %v404 = vld [vmem:[%s361 + $0x18] sm:$0xf]
      %v405 = vld [vmem:[%s361 + $0x1c] sm:$0xf]
      %v406 = vld [vmem:[%s361 + $0x20] sm:$0xf]
      %v407 = vld [vmem:[%s361 + $0x24] sm:$0xf]
      %v408 = vld [vmem:[%s361 + $0x28] sm:$0xf]
      %v409 = vld [vmem:[%s361 + $0x2c] sm:$0xf]
      %v410 = vld [vmem:[%s361 + $0x30] sm:$0xf]
      %v411 = vld [vmem:[%s361 + $0x34] sm:$0xf]
      %v412 = vld [vmem:[%s361 + $0x38] sm:$0xf]
      %v413 = vld [vmem:[%s361 + $0x3c] sm:$0xf]
      %v414 = vld [vmem:[%s367] sm:$0xf]
      %v415 = vld [vmem:[%s367 + $0x4] sm:$0xf]
      %v416 = vld [vmem:[%s367 + $0x8] sm:$0xf]
      %v417 = vld [vmem:[%s367 + $0xc] sm:$0xf]
      %v418 = vld [vmem:[%s367 + $0x10] sm:$0xf]
      %v419 = vld [vmem:[%s367 + $0x14] sm:$0xf]
      %v420 = vld [vmem:[%s367 + $0x18] sm:$0xf]
      %v421 = vld [vmem:[%s367 + $0x1c] sm:$0xf]
      %v422 = vld [vmem:[%s367 + $0x20] sm:$0xf]
      %v423 = vld [vmem:[%s367 + $0x24] sm:$0xf]
      %v424 = vld [vmem:[%s367 + $0x28] sm:$0xf]
      %v425 = vld [vmem:[%s367 + $0x2c] sm:$0xf]
      %v426 = vld [vmem:[%s367 + $0x30] sm:$0xf]
      %v427 = vld [vmem:[%s367 + $0x34] sm:$0xf]
      %v428 = vld [vmem:[%s367 + $0x38] sm:$0xf]
      %v429 = vld [vmem:[%s367 + $0x3c] sm:$0xf]
      %v446 = vunpack.c.l.b16 %v398
      %v447 = vunpack.c.l.b16 %v399
      %v448 = vunpack.c.l.b16 %v400
      %v449 = vunpack.c.l.b16 %v401
      %v450 = vunpack.c.l.b16 %v402
      %v451 = vunpack.c.l.b16 %v403
      %v452 = vunpack.c.l.b16 %v404
      %v453 = vunpack.c.l.b16 %v405
      %v454 = vunpack.c.l.b16 %v406
      %v455 = vunpack.c.l.b16 %v407
      %v456 = vunpack.c.l.b16 %v408
      %v457 = vunpack.c.l.b16 %v409
      %v458 = vunpack.c.l.b16 %v410
      %v459 = vunpack.c.l.b16 %v411
      %v460 = vunpack.c.l.b16 %v412
      %v461 = vunpack.c.l.b16 %v413
      %v462 = vpack.c.b16 %v447, %v446
      %v463 = vpack.c.b16 %v449, %v448
      %v464 = vpack.c.b16 %v451, %v450
      %v465 = vpack.c.b16 %v453, %v452
      %v466 = vpack.c.b16 %v455, %v454
      %v467 = vpack.c.b16 %v457, %v456
      %v468 = vpack.c.b16 %v459, %v458
      %v469 = vpack.c.b16 %v461, %v460
      %v494 = vunpack.c.l.b16 %v414
      %v495 = vunpack.c.l.b16 %v415
      %v496 = vunpack.c.l.b16 %v416
      %v497 = vunpack.c.l.b16 %v417
      %v498 = vunpack.c.l.b16 %v418
      %v499 = vunpack.c.l.b16 %v419
      %v500 = vunpack.c.l.b16 %v420
      %v501 = vunpack.c.l.b16 %v421
      %v502 = vunpack.c.l.b16 %v422
      %v503 = vunpack.c.l.b16 %v423
      %v504 = vunpack.c.l.b16 %v424
      %v505 = vunpack.c.l.b16 %v425
      %v506 = vunpack.c.l.b16 %v426
      %v507 = vunpack.c.l.b16 %v427
      %v508 = vunpack.c.l.b16 %v428
      %v509 = vunpack.c.l.b16 %v429
      %v510 = vpack.c.b16 %v495, %v494
      %v511 = vpack.c.b16 %v497, %v496
      %v512 = vpack.c.b16 %v499, %v498
      %v513 = vpack.c.b16 %v501, %v500
      %v514 = vpack.c.b16 %v503, %v502
      %v515 = vpack.c.b16 %v505, %v504
      %v516 = vpack.c.b16 %v507, %v506
      %v517 = vpack.c.b16 %v509, %v508
      %526 = vmatprep.subr.bf16.mxu0 0
      %527 = vmatpush1.bf16.msra.mxu0 %v517
      %528 = vmatprep.subr.bf16.mxu0 0
      %529 = vmatpush1.bf16.msra.mxu0 %v516
      %530 = vmatprep.subr.bf16.mxu0 0
      %531 = vmatpush1.bf16.msra.mxu0 %v515
      %532 = vmatprep.subr.bf16.mxu0 0
      %533 = vmatpush1.bf16.msra.mxu0 %v514
      %534 = vmatprep.subr.bf16.mxu0 0
      %535 = vmatpush1.bf16.msra.mxu0 %v513
      %536 = vmatprep.subr.bf16.mxu0 0
      %537 = vmatpush1.bf16.msra.mxu0 %v512
      %538 = vmatprep.subr.bf16.mxu0 0
      %539 = vmatpush1.bf16.msra.mxu0 %v511
      %540 = vmatprep.subr.bf16.mxu0 0
      %541 = vmatpush1.bf16.msra.mxu0 %v510
      %542 = vmatprep.subr.bf16.mxu0 0
      %543 = vmatpush2.bf16.msra.mxu0 0
      %544 = vmatprep.subr.bf16.mxu0 0
      %545 = vmatpush2.bf16.msra.mxu0 0
      %546 = vmatprep.subr.bf16.mxu0 0
      %547 = vmatpush2.bf16.msra.mxu0 0
      %548 = vmatprep.subr.bf16.mxu0 0
      %549 = vmatpush2.bf16.msra.mxu0 0
      %550 = vmatprep.subr.bf16.mxu0 0
      %551 = vmatpush2.bf16.msra.mxu0 0
      %552 = vmatprep.subr.bf16.mxu0 0
      %553 = vmatpush2.bf16.msra.mxu0 0
      %554 = vmatprep.subr.bf16.mxu0 0
      %555 = vmatpush2.bf16.msra.mxu0 0
      %556 = vmatprep.subr.bf16.mxu0 0
      %557 = vmatpush2.bf16.msra.mxu0 0
      %558 = vmatprep.mubr.bf16.mxu0 0
      %559 = vmatmul.mubr.bf16.gmra.mxu0 %v462
      %v560 = vpop.f32.mrf.mxu0
      %v561 = vadd.f32 0.0, %v560
      %v562 = vpop.f32.mrf.mxu0
      %v563 = vpop.f32.mrf.mxu0
      %v564 = vadd.f32 0.0, %v563
      %v565 = vpop.f32.mrf.mxu0
      %566 = vmatprep.mubr.bf16.mxu0 0
      %567 = vmatmul.mubr.bf16.gmra.mxu0 %v463
      %v568 = vpop.f32.mrf.mxu0
      %v569 = vadd.f32 0.0, %v568
      %v570 = vpop.f32.mrf.mxu0
      %v571 = vpop.f32.mrf.mxu0
      %v572 = vadd.f32 0.0, %v571
      %v573 = vpop.f32.mrf.mxu0
      %574 = vmatprep.mubr.bf16.mxu0 0
      %575 = vmatmul.mubr.bf16.gmra.mxu0 %v464
      %v576 = vpop.f32.mrf.mxu0
      %v577 = vadd.f32 0.0, %v576
      %v578 = vpop.f32.mrf.mxu0
      %v579 = vpop.f32.mrf.mxu0
      %v580 = vadd.f32 0.0, %v579
      %v581 = vpop.f32.mrf.mxu0
      %582 = vmatprep.mubr.bf16.mxu0 0
      %583 = vmatmul.mubr.bf16.gmra.mxu0 %v465
      %v584 = vpop.f32.mrf.mxu0
      %v585 = vadd.f32 0.0, %v584
      %v586 = vpop.f32.mrf.mxu0
      %v587 = vpop.f32.mrf.mxu0
      %v588 = vadd.f32 0.0, %v587
      %v589 = vpop.f32.mrf.mxu0
      %590 = vmatprep.mubr.bf16.mxu0 0
      %591 = vmatmul.mubr.bf16.gmra.mxu0 %v466
      %v592 = vpop.f32.mrf.mxu0
      %v593 = vadd.f32 0.0, %v592
      %v594 = vpop.f32.mrf.mxu0
      %v595 = vpop.f32.mrf.mxu0
      %v596 = vadd.f32 0.0, %v595
      %v597 = vpop.f32.mrf.mxu0
      %598 = vmatprep.mubr.bf16.mxu0 0
      %599 = vmatmul.mubr.bf16.gmra.mxu0 %v467
      %v600 = vpop.f32.mrf.mxu0
      %v601 = vadd.f32 0.0, %v600
      %v602 = vpop.f32.mrf.mxu0
      %v603 = vpop.f32.mrf.mxu0
      %v604 = vadd.f32 0.0, %v603
      %v605 = vpop.f32.mrf.mxu0
      %606 = vmatprep.mubr.bf16.mxu0 0
      %607 = vmatmul.mubr.bf16.gmra.mxu0 %v468
      %v608 = vpop.f32.mrf.mxu0
      %v609 = vadd.f32 0.0, %v608
      %v610 = vpop.f32.mrf.mxu0
      %v611 = vpop.f32.mrf.mxu0
      %v612 = vadd.f32 0.0, %v611
      %v613 = vpop.f32.mrf.mxu0
      %614 = vmatprep.mubr.bf16.mxu0 0
      %615 = vmatmul.mubr.bf16.gmra.mxu0 %v469
      %v616 = vpop.f32.mrf.mxu0
      %v617 = vadd.f32 0.0, %v616
      %v618 = vpop.f32.mrf.mxu0
      %v619 = vpop.f32.mrf.mxu0
      %v620 = vadd.f32 0.0, %v619
      %v621 = vpop.f32.mrf.mxu0
      %622 = vdwg.mxu0
      %v623 = vmul.f32 %v561, 5.0
      %v624 = vmul.f32 %v564, 5.0
      %v625 = vmul.f32 %v569, 5.0
      %v626 = vmul.f32 %v572, 5.0
      %v627 = vmul.f32 %v577, 5.0
      %v628 = vmul.f32 %v580, 5.0
      %v629 = vmul.f32 %v585, 5.0
      %v630 = vmul.f32 %v588, 5.0
      %v631 = vmul.f32 %v593, 5.0
      %v632 = vmul.f32 %v596, 5.0
      %v633 = vmul.f32 %v601, 5.0
      %v634 = vmul.f32 %v604, 5.0
      %v635 = vmul.f32 %v609, 5.0
      %v636 = vmul.f32 %v612, 5.0
      %v637 = vmul.f32 %v617, 5.0
      %v638 = vmul.f32 %v620, 5.0
      %v639 = vld [vmem:[%s2] sm:$0x1]
      %v641 = vlaneseq
      %v642 = vshrl.u32 %v641, 7
      %v643 = vsub.s32 0, %v642
      %v644 = vrot.slane %v639, %v643
      %v646 = vadd.f32 %v623, %v644
      %v647 = vadd.f32 %v624, %v644
      %v648 = vadd.f32 %v625, %v644
      %v649 = vadd.f32 %v626, %v644
      %v650 = vadd.f32 %v627, %v644
      %v651 = vadd.f32 %v628, %v644
      %v652 = vadd.f32 %v629, %v644
      %v653 = vadd.f32 %v630, %v644
      %v654 = vadd.f32 %v631, %v644
      %v655 = vadd.f32 %v632, %v644
      %v656 = vadd.f32 %v633, %v644
      %v657 = vadd.f32 %v634, %v644
      %v658 = vadd.f32 %v635, %v644
      %v659 = vadd.f32 %v636, %v644
      %v660 = vadd.f32 %v637, %v644
      %v661 = vadd.f32 %v638, %v644
      %662 = vmax.xlane.f32.xlu0 %v646
      %v663 = vpop.xlane.xlu0 %662
      %664 = vmax.xlane.f32.xlu0 %v647
      %v665 = vpop.xlane.xlu0 %664
      %666 = vmax.xlane.f32.xlu0 %v648
      %v667 = vpop.xlane.xlu0 %666
      %668 = vmax.xlane.f32.xlu0 %v649
      %v669 = vpop.xlane.xlu0 %668
      %670 = vmax.xlane.f32.xlu0 %v650
      %v671 = vpop.xlane.xlu0 %670
      %672 = vmax.xlane.f32.xlu0 %v651
      %v673 = vpop.xlane.xlu0 %672
      %674 = vmax.xlane.f32.xlu0 %v652
      %v675 = vpop.xlane.xlu0 %674
      %676 = vmax.xlane.f32.xlu0 %v653
      %v677 = vpop.xlane.xlu0 %676
      %678 = vmax.xlane.f32.xlu0 %v654
      %v679 = vpop.xlane.xlu0 %678
      %680 = vmax.xlane.f32.xlu0 %v655
      %v681 = vpop.xlane.xlu0 %680
      %682 = vmax.xlane.f32.xlu0 %v656
      %v683 = vpop.xlane.xlu0 %682
      %684 = vmax.xlane.f32.xlu0 %v657
      %v685 = vpop.xlane.xlu0 %684
      %686 = vmax.xlane.f32.xlu0 %v658
      %v687 = vpop.xlane.xlu0 %686
      %688 = vmax.xlane.f32.xlu0 %v659
      %v689 = vpop.xlane.xlu0 %688
      %690 = vmax.xlane.f32.xlu0 %v660
      %v691 = vpop.xlane.xlu0 %690
      %692 = vmax.xlane.f32.xlu0 %v661
      %v693 = vpop.xlane.xlu0 %692
      %v694 = vsub.f32 %v623, %v663
      %v695 = vsub.f32 %v624, %v665
      %v696 = vsub.f32 %v625, %v667
      %v697 = vsub.f32 %v626, %v669
      %v698 = vsub.f32 %v627, %v671
      %v699 = vsub.f32 %v628, %v673
      %v700 = vsub.f32 %v629, %v675
      %v701 = vsub.f32 %v630, %v677
      %v702 = vsub.f32 %v631, %v679
      %v703 = vsub.f32 %v632, %v681
      %v704 = vsub.f32 %v633, %v683
      %v705 = vsub.f32 %v634, %v685
      %v706 = vsub.f32 %v635, %v687
      %v707 = vsub.f32 %v636, %v689
      %v708 = vsub.f32 %v637, %v691
      %v709 = vsub.f32 %v638, %v693
      %v710 = vmul.f32 %v694, 1.442695
      %v711 = vpow.pop %v710
      %v712 = vmul.f32 %v695, 1.442695
      %v713 = vpow.pop %v712
      %v714 = vmul.f32 %v696, 1.442695
      %v715 = vpow.pop %v714
      %v716 = vmul.f32 %v697, 1.442695
      %v717 = vpow.pop %v716
      %v718 = vmul.f32 %v698, 1.442695
      %v719 = vpow.pop %v718
      %v720 = vmul.f32 %v699, 1.442695
      %v721 = vpow.pop %v720
      %v722 = vmul.f32 %v700, 1.442695
      %v723 = vpow.pop %v722
      %v724 = vmul.f32 %v701, 1.442695
      %v725 = vpow.pop %v724
      %v726 = vmul.f32 %v702, 1.442695
      %v727 = vpow.pop %v726
      %v728 = vmul.f32 %v703, 1.442695
      %v729 = vpow.pop %v728
      %v730 = vmul.f32 %v704, 1.442695
      %v731 = vpow.pop %v730
      %v732 = vmul.f32 %v705, 1.442695
      %v733 = vpow.pop %v732
      %v734 = vmul.f32 %v706, 1.442695
      %v735 = vpow.pop %v734
      %v736 = vmul.f32 %v707, 1.442695
      %v737 = vpow.pop %v736
      %v738 = vmul.f32 %v708, 1.442695
      %v739 = vpow.pop %v738
      %v740 = vmul.f32 %v709, 1.442695
      %v741 = vpow.pop %v740
      %v742 = vld [vmem:[%s370] sm:$0x1]
      %v744 = vlaneseq
      %v745 = vshrl.u32 %v744, 7
      %v746 = vsub.s32 0, %v745
      %v747 = vrot.slane %v742, %v746
      %v749 = vmul.f32 %v711, %v747
      %v750 = vmul.f32 %v713, %v747
      %v751 = vmul.f32 %v715, %v747
      %v752 = vmul.f32 %v717, %v747
      %v753 = vmul.f32 %v719, %v747
      %v754 = vmul.f32 %v721, %v747
      %v755 = vmul.f32 %v723, %v747
      %v756 = vmul.f32 %v725, %v747
      %v757 = vmul.f32 %v727, %v747
      %v758 = vmul.f32 %v729, %v747
      %v759 = vmul.f32 %v731, %v747
      %v760 = vmul.f32 %v733, %v747
      %v761 = vmul.f32 %v735, %v747
      %v762 = vmul.f32 %v737, %v747
      %v763 = vmul.f32 %v739, %v747
      %v764 = vmul.f32 %v741, %v747
      %765 = vadd.xlane.f32.xlu0 %v749
      %v766 = vpop.xlane.xlu0 %765
      %767 = vadd.xlane.f32.xlu0 %v750
      %v768 = vpop.xlane.xlu0 %767
      %769 = vadd.xlane.f32.xlu0 %v751
      %v770 = vpop.xlane.xlu0 %769
      %771 = vadd.xlane.f32.xlu0 %v752
      %v772 = vpop.xlane.xlu0 %771
      %773 = vadd.xlane.f32.xlu0 %v753
      %v774 = vpop.xlane.xlu0 %773
      %775 = vadd.xlane.f32.xlu0 %v754
      %v776 = vpop.xlane.xlu0 %775
      %777 = vadd.xlane.f32.xlu0 %v755
      %v778 = vpop.xlane.xlu0 %777
      %779 = vadd.xlane.f32.xlu0 %v756
      %v780 = vpop.xlane.xlu0 %779
      %781 = vadd.xlane.f32.xlu0 %v757
      %v782 = vpop.xlane.xlu0 %781
      %783 = vadd.xlane.f32.xlu0 %v758
      %v784 = vpop.xlane.xlu0 %783
      %785 = vadd.xlane.f32.xlu0 %v759
      %v786 = vpop.xlane.xlu0 %785
      %787 = vadd.xlane.f32.xlu0 %v760
      %v788 = vpop.xlane.xlu0 %787
      %789 = vadd.xlane.f32.xlu0 %v761
      %v790 = vpop.xlane.xlu0 %789
      %791 = vadd.xlane.f32.xlu0 %v762
      %v792 = vpop.xlane.xlu0 %791
      %793 = vadd.xlane.f32.xlu0 %v763
      %v794 = vpop.xlane.xlu0 %793
      %795 = vadd.xlane.f32.xlu0 %v764
      %v796 = vpop.xlane.xlu0 %795
      %p797 = scmp.eq.s32.totalorder %s24, 0
      // Predicated region
      $region45: #{tpu_custom_call.1} parent=43 // pred_check
        %p798 = pneg %p797
      $region46: #{tpu_custom_call.1} parent=43 // pred_check_branch
        %800 = sbr.rel (%p798) target = $region48
      $region47: #{tpu_custom_call.1} parent=43 // pred_region
        %vm801 = vcmask 7168
        %802 = vst.msk [vmem:[#allocation2] sm:$0xff] %vm801, 0.0
        %803 = vst.msk [vmem:[#allocation2 + $0x8] sm:$0xff] %vm801, 0.0
        %804 = vst.msk [vmem:[#allocation2 + $0x10] sm:$0xff] %vm801, 0.0
        %805 = vst.msk [vmem:[#allocation2 + $0x18] sm:$0xff] %vm801, 0.0
        %806 = vst.msk [vmem:[#allocation2 + $0x20] sm:$0xff] %vm801, 0.0
        %807 = vst.msk [vmem:[#allocation2 + $0x28] sm:$0xff] %vm801, 0.0
        %808 = vst.msk [vmem:[#allocation2 + $0x30] sm:$0xff] %vm801, 0.0
        %809 = vst.msk [vmem:[#allocation2 + $0x38] sm:$0xff] %vm801, 0.0
        %810 = vst.msk [vmem:[#allocation2 + $0x40] sm:$0xff] %vm801, 0.0
        %811 = vst.msk [vmem:[#allocation2 + $0x48] sm:$0xff] %vm801, 0.0
        %812 = vst.msk [vmem:[#allocation2 + $0x50] sm:$0xff] %vm801, 0.0
        %813 = vst.msk [vmem:[#allocation2 + $0x58] sm:$0xff] %vm801, 0.0
        %814 = vst.msk [vmem:[#allocation2 + $0x60] sm:$0xff] %vm801, 0.0
        %815 = vst.msk [vmem:[#allocation2 + $0x68] sm:$0xff] %vm801, 0.0
        %816 = vst.msk [vmem:[#allocation2 + $0x70] sm:$0xff] %vm801, 0.0
        %817 = vst.msk [vmem:[#allocation2 + $0x78] sm:$0xff] %vm801, 0.0
      $region48: #{tpu_custom_call.1} parent=43 // pred_fallthru
        _
      %v818 = vld [vmem:[#allocation2] sm:$0xff]
      %v819 = vld [vmem:[#allocation2 + $0x8] sm:$0xff]
      %v820 = vld [vmem:[#allocation2 + $0x10] sm:$0xff]
      %v821 = vld [vmem:[#allocation2 + $0x18] sm:$0xff]
      %v822 = vld [vmem:[#allocation2 + $0x20] sm:$0xff]
      %v823 = vld [vmem:[#allocation2 + $0x28] sm:$0xff]
      %v824 = vld [vmem:[#allocation2 + $0x30] sm:$0xff]
      %v825 = vld [vmem:[#allocation2 + $0x38] sm:$0xff]
      %v826 = vld [vmem:[#allocation2 + $0x40] sm:$0xff]
      %v827 = vld [vmem:[#allocation2 + $0x48] sm:$0xff]
      %v828 = vld [vmem:[#allocation2 + $0x50] sm:$0xff]
      %v829 = vld [vmem:[#allocation2 + $0x58] sm:$0xff]
      %v830 = vld [vmem:[#allocation2 + $0x60] sm:$0xff]
      %v831 = vld [vmem:[#allocation2 + $0x68] sm:$0xff]
      %v832 = vld [vmem:[#allocation2 + $0x70] sm:$0xff]
      %v833 = vld [vmem:[#allocation2 + $0x78] sm:$0xff]
      %v834 = vadd.f32 %v818, %v766
      %v835 = vadd.f32 %v819, %v768
      %v836 = vadd.f32 %v820, %v770
      %v837 = vadd.f32 %v821, %v772
      %v838 = vadd.f32 %v822, %v774
      %v839 = vadd.f32 %v823, %v776
      %v840 = vadd.f32 %v824, %v778
      %v841 = vadd.f32 %v825, %v780
      %v842 = vadd.f32 %v826, %v782
      %v843 = vadd.f32 %v827, %v784
      %v844 = vadd.f32 %v828, %v786
      %v845 = vadd.f32 %v829, %v788
      %v846 = vadd.f32 %v830, %v790
      %v847 = vadd.f32 %v831, %v792
      %v848 = vadd.f32 %v832, %v794
      %v849 = vadd.f32 %v833, %v796
      %vm850 = vcmask 7168
      %851 = vst.msk [vmem:[#allocation2] sm:$0xff] %vm850, %v834
      %852 = vst.msk [vmem:[#allocation2 + $0x8] sm:$0xff] %vm850, %v835
      %853 = vst.msk [vmem:[#allocation2 + $0x10] sm:$0xff] %vm850, %v836
      %854 = vst.msk [vmem:[#allocation2 + $0x18] sm:$0xff] %vm850, %v837
      %855 = vst.msk [vmem:[#allocation2 + $0x20] sm:$0xff] %vm850, %v838
      %856 = vst.msk [vmem:[#allocation2 + $0x28] sm:$0xff] %vm850, %v839
      %857 = vst.msk [vmem:[#allocation2 + $0x30] sm:$0xff] %vm850, %v840
      %858 = vst.msk [vmem:[#allocation2 + $0x38] sm:$0xff] %vm850, %v841
      %859 = vst.msk [vmem:[#allocation2 + $0x40] sm:$0xff] %vm850, %v842
      %860 = vst.msk [vmem:[#allocation2 + $0x48] sm:$0xff] %vm850, %v843
      %861 = vst.msk [vmem:[#allocation2 + $0x50] sm:$0xff] %vm850, %v844
      %862 = vst.msk [vmem:[#allocation2 + $0x58] sm:$0xff] %vm850, %v845
      %863 = vst.msk [vmem:[#allocation2 + $0x60] sm:$0xff] %vm850, %v846
      %864 = vst.msk [vmem:[#allocation2 + $0x68] sm:$0xff] %vm850, %v847
      %865 = vst.msk [vmem:[#allocation2 + $0x70] sm:$0xff] %vm850, %v848
      %866 = vst.msk [vmem:[#allocation2 + $0x78] sm:$0xff] %vm850, %v849
      %p867 = scmp.eq.s32.totalorder %s22, %s24
      // Predicated region
      $region49: #{tpu_custom_call.1} parent=43 // pred_check
        %p868 = pneg %p867
      $region50: #{tpu_custom_call.1} parent=43 // pred_check_branch
        %870 = sbr.rel (%p868) target = $region52
      $region51: #{tpu_custom_call.1} parent=43 // pred_region
        %v871 = vlaneseq
        %v872 = vshrl.u32 %v871, 7
        %v873 = vadd.s32 %v872, 8
        %v874 = vadd.s32 %v872, 16
        %v875 = vadd.s32 %v872, 24
        %v876 = vadd.s32 %v872, 32
        %v877 = vadd.s32 %v872, 40
        %v878 = vadd.s32 %v872, 48
        %v879 = vadd.s32 %v872, 56
        %v880 = vadd.s32 %v872, 64
        %v881 = vadd.s32 %v872, 72
        %v882 = vadd.s32 %v872, 80
        %v883 = vadd.s32 %v872, 88
        %v884 = vadd.s32 %v872, 96
        %v885 = vadd.s32 %v872, 104
        %v886 = vadd.s32 %v872, 112
        %v887 = vadd.s32 %v872, 120
        %s888 = smul.u32 %s23, 128
        %v889 = vstv %s888
        %v890 = vadd.s32 %v872, %v889
        %v891 = vadd.s32 %v873, %v889
        %v892 = vadd.s32 %v874, %v889
        %v893 = vadd.s32 %v875, %v889
        %v894 = vadd.s32 %v876, %v889
        %v895 = vadd.s32 %v877, %v889
        %v896 = vadd.s32 %v878, %v889
        %v897 = vadd.s32 %v879, %v889
        %v898 = vadd.s32 %v880, %v889
        %v899 = vadd.s32 %v881, %v889
        %v900 = vadd.s32 %v882, %v889
        %v901 = vadd.s32 %v883, %v889
        %v902 = vadd.s32 %v884, %v889
        %v903 = vadd.s32 %v885, %v889
        %v904 = vadd.s32 %v886, %v889
        %v905 = vadd.s32 %v887, %v889
        %v906 = vlaneseq
        %v907 = vand.u32 %v906, 127
        %vm908 = vcmp.eq.s32.totalorder %v890, %v907
        %vm909 = vcmp.eq.s32.totalorder %v891, %v907
        %vm910 = vcmp.eq.s32.totalorder %v892, %v907
        %vm911 = vcmp.eq.s32.totalorder %v893, %v907
        %vm912 = vcmp.eq.s32.totalorder %v894, %v907
        %vm913 = vcmp.eq.s32.totalorder %v895, %v907
        %vm914 = vcmp.eq.s32.totalorder %v896, %v907
        %vm915 = vcmp.eq.s32.totalorder %v897, %v907
        %vm916 = vcmp.eq.s32.totalorder %v898, %v907
        %vm917 = vcmp.eq.s32.totalorder %v899, %v907
        %vm918 = vcmp.eq.s32.totalorder %v900, %v907
        %vm919 = vcmp.eq.s32.totalorder %v901, %v907
        %vm920 = vcmp.eq.s32.totalorder %v902, %v907
        %vm921 = vcmp.eq.s32.totalorder %v903, %v907
        %vm922 = vcmp.eq.s32.totalorder %v904, %v907
        %vm923 = vcmp.eq.s32.totalorder %v905, %v907
        %v924 = vsel %vm908, 1, 0
        %v925 = vsel %vm909, 1, 0
        %v926 = vsel %vm910, 1, 0
        %v927 = vsel %vm911, 1, 0
        %v928 = vsel %vm912, 1, 0
        %v929 = vsel %vm913, 1, 0
        %v930 = vsel %vm914, 1, 0
        %v931 = vsel %vm915, 1, 0
        %v932 = vsel %vm916, 1, 0
        %v933 = vsel %vm917, 1, 0
        %v934 = vsel %vm918, 1, 0
        %v935 = vsel %vm919, 1, 0
        %v936 = vsel %vm920, 1, 0
        %v937 = vsel %vm921, 1, 0
        %v938 = vsel %vm922, 1, 0
        %v939 = vsel %vm923, 1, 0
        %v940 = vcvt.s32.f32 %v924
        %v941 = vcvt.s32.f32 %v925
        %v942 = vcvt.s32.f32 %v926
        %v943 = vcvt.s32.f32 %v927
        %v944 = vcvt.s32.f32 %v928
        %v945 = vcvt.s32.f32 %v929
        %v946 = vcvt.s32.f32 %v930
        %v947 = vcvt.s32.f32 %v931
        %v948 = vcvt.s32.f32 %v932
        %v949 = vcvt.s32.f32 %v933
        %v950 = vcvt.s32.f32 %v934
        %v951 = vcvt.s32.f32 %v935
        %v952 = vcvt.s32.f32 %v936
        %v953 = vcvt.s32.f32 %v937
        %v954 = vcvt.s32.f32 %v938
        %v955 = vcvt.s32.f32 %v939
        %v956 = vld [vmem:[#allocation2] sm:$0xff]
        %v957 = vld [vmem:[#allocation2 + $0x8] sm:$0xff]
        %v958 = vld [vmem:[#allocation2 + $0x10] sm:$0xff]
        %v959 = vld [vmem:[#allocation2 + $0x18] sm:$0xff]
        %v960 = vld [vmem:[#allocation2 + $0x20] sm:$0xff]
        %v961 = vld [vmem:[#allocation2 + $0x28] sm:$0xff]
        %v962 = vld [vmem:[#allocation2 + $0x30] sm:$0xff]
        %v963 = vld [vmem:[#allocation2 + $0x38] sm:$0xff]
        %v964 = vld [vmem:[#allocation2 + $0x40] sm:$0xff]
        %v965 = vld [vmem:[#allocation2 + $0x48] sm:$0xff]
        %v966 = vld [vmem:[#allocation2 + $0x50] sm:$0xff]
        %v967 = vld [vmem:[#allocation2 + $0x58] sm:$0xff]
        %v968 = vld [vmem:[#allocation2 + $0x60] sm:$0xff]
        %v969 = vld [vmem:[#allocation2 + $0x68] sm:$0xff]
        %v970 = vld [vmem:[#allocation2 + $0x70] sm:$0xff]
        %v971 = vld [vmem:[#allocation2 + $0x78] sm:$0xff]
        %v972 = vmul.f32 %v749, %v940
        %v973 = vmul.f32 %v750, %v941
        %v974 = vmul.f32 %v751, %v942
        %v975 = vmul.f32 %v752, %v943
        %v976 = vmul.f32 %v753, %v944
        %v977 = vmul.f32 %v754, %v945
        %v978 = vmul.f32 %v755, %v946
        %v979 = vmul.f32 %v756, %v947
        %v980 = vmul.f32 %v757, %v948
        %v981 = vmul.f32 %v758, %v949
        %v982 = vmul.f32 %v759, %v950
        %v983 = vmul.f32 %v760, %v951
        %v984 = vmul.f32 %v761, %v952
        %v985 = vmul.f32 %v762, %v953
        %v986 = vmul.f32 %v763, %v954
        %v987 = vmul.f32 %v764, %v955
        %988 = vadd.xlane.f32.xlu0 %v972
        %v989 = vpop.xlane.xlu0 %988
        %990 = vadd.xlane.f32.xlu0 %v973
        %v991 = vpop.xlane.xlu0 %990
        %992 = vadd.xlane.f32.xlu0 %v974
        %v993 = vpop.xlane.xlu0 %992
        %994 = vadd.xlane.f32.xlu0 %v975
        %v995 = vpop.xlane.xlu0 %994
        %996 = vadd.xlane.f32.xlu0 %v976
        %v997 = vpop.xlane.xlu0 %996
        %998 = vadd.xlane.f32.xlu0 %v977
        %v999 = vpop.xlane.xlu0 %998
        %1000 = vadd.xlane.f32.xlu0 %v978
        %v1001 = vpop.xlane.xlu0 %1000
        %1002 = vadd.xlane.f32.xlu0 %v979
        %v1003 = vpop.xlane.xlu0 %1002
        %1004 = vadd.xlane.f32.xlu0 %v980
        %v1005 = vpop.xlane.xlu0 %1004
        %1006 = vadd.xlane.f32.xlu0 %v981
        %v1007 = vpop.xlane.xlu0 %1006
        %1008 = vadd.xlane.f32.xlu0 %v982
        %v1009 = vpop.xlane.xlu0 %1008
        %1010 = vadd.xlane.f32.xlu0 %v983
        %v1011 = vpop.xlane.xlu0 %1010
        %1012 = vadd.xlane.f32.xlu0 %v984
        %v1013 = vpop.xlane.xlu0 %1012
        %1014 = vadd.xlane.f32.xlu0 %v985
        %v1015 = vpop.xlane.xlu0 %1014
        %1016 = vadd.xlane.f32.xlu0 %v986
        %v1017 = vpop.xlane.xlu0 %1016
        %1018 = vadd.xlane.f32.xlu0 %v987
        %v1019 = vpop.xlane.xlu0 %1018
        %v1020 = vsub.f32 %v956, %v989
        %v1021 = vsub.f32 %v957, %v991
        %v1022 = vsub.f32 %v958, %v993
        %v1023 = vsub.f32 %v959, %v995
        %v1024 = vsub.f32 %v960, %v997
        %v1025 = vsub.f32 %v961, %v999
        %v1026 = vsub.f32 %v962, %v1001
        %v1027 = vsub.f32 %v963, %v1003
        %v1028 = vsub.f32 %v964, %v1005
        %v1029 = vsub.f32 %v965, %v1007
        %v1030 = vsub.f32 %v966, %v1009
        %v1031 = vsub.f32 %v967, %v1011
        %v1032 = vsub.f32 %v968, %v1013
        %v1033 = vsub.f32 %v969, %v1015
        %v1034 = vsub.f32 %v970, %v1017
        %v1035 = vsub.f32 %v971, %v1019
        %1036 = vst.msk [vmem:[#allocation2] sm:$0xff] %vm850, %v1020
        %1037 = vst.msk [vmem:[#allocation2 + $0x8] sm:$0xff] %vm850, %v1021
        %1038 = vst.msk [vmem:[#allocation2 + $0x10] sm:$0xff] %vm850, %v1022
        %1039 = vst.msk [vmem:[#allocation2 + $0x18] sm:$0xff] %vm850, %v1023
        %1040 = vst.msk [vmem:[#allocation2 + $0x20] sm:$0xff] %vm850, %v1024
        %1041 = vst.msk [vmem:[#allocation2 + $0x28] sm:$0xff] %vm850, %v1025
        %1042 = vst.msk [vmem:[#allocation2 + $0x30] sm:$0xff] %vm850, %v1026
        %1043 = vst.msk [vmem:[#allocation2 + $0x38] sm:$0xff] %vm850, %v1027
        %1044 = vst.msk [vmem:[#allocation2 + $0x40] sm:$0xff] %vm850, %v1028
        %1045 = vst.msk [vmem:[#allocation2 + $0x48] sm:$0xff] %vm850, %v1029
        %1046 = vst.msk [vmem:[#allocation2 + $0x50] sm:$0xff] %vm850, %v1030
        %1047 = vst.msk [vmem:[#allocation2 + $0x58] sm:$0xff] %vm850, %v1031
        %1048 = vst.msk [vmem:[#allocation2 + $0x60] sm:$0xff] %vm850, %v1032
        %1049 = vst.msk [vmem:[#allocation2 + $0x68] sm:$0xff] %vm850, %v1033
        %1050 = vst.msk [vmem:[#allocation2 + $0x70] sm:$0xff] %vm850, %v1034
        %1051 = vst.msk [vmem:[#allocation2 + $0x78] sm:$0xff] %vm850, %v1035
      $region52: #{tpu_custom_call.1} parent=43 // pred_fallthru
        _
      %p1052 = scmp.eq.s32.totalorder %s24, 3
      // Predicated region
      $region53: #{tpu_custom_call.1} parent=43 // pred_check
        %p1053 = pneg %p1052
      $region54: #{tpu_custom_call.1} parent=43 // pred_check_branch
        %1055 = sbr.rel (%p1053) target = $region56
      $region55: #{tpu_custom_call.1} parent=43 // pred_region
        %v1056 = vld [vmem:[%s379] sm:$0xff]
        %v1057 = vld [vmem:[%s379 + $0x8] sm:$0xff]
        %v1058 = vld [vmem:[%s379 + $0x10] sm:$0xff]
        %v1059 = vld [vmem:[%s379 + $0x18] sm:$0xff]
        %v1060 = vld [vmem:[%s379 + $0x20] sm:$0xff]
        %v1061 = vld [vmem:[%s379 + $0x28] sm:$0xff]
        %v1062 = vld [vmem:[%s379 + $0x30] sm:$0xff]
        %v1063 = vld [vmem:[%s379 + $0x38] sm:$0xff]
        %v1064 = vld [vmem:[%s379 + $0x40] sm:$0xff]
        %v1065 = vld [vmem:[%s379 + $0x48] sm:$0xff]
        %v1066 = vld [vmem:[%s379 + $0x50] sm:$0xff]
        %v1067 = vld [vmem:[%s379 + $0x58] sm:$0xff]
        %v1068 = vld [vmem:[%s379 + $0x60] sm:$0xff]
        %v1069 = vld [vmem:[%s379 + $0x68] sm:$0xff]
        %v1070 = vld [vmem:[%s379 + $0x70] sm:$0xff]
        %v1071 = vld [vmem:[%s379 + $0x78] sm:$0xff]
        %v1072 = vld [vmem:[#allocation2] sm:$0xff]
        %v1073 = vld [vmem:[#allocation2 + $0x8] sm:$0xff]
        %v1074 = vld [vmem:[#allocation2 + $0x10] sm:$0xff]
        %v1075 = vld [vmem:[#allocation2 + $0x18] sm:$0xff]
        %v1076 = vld [vmem:[#allocation2 + $0x20] sm:$0xff]
        %v1077 = vld [vmem:[#allocation2 + $0x28] sm:$0xff]
        %v1078 = vld [vmem:[#allocation2 + $0x30] sm:$0xff]
        %v1079 = vld [vmem:[#allocation2 + $0x38] sm:$0xff]
        %v1080 = vld [vmem:[#allocation2 + $0x40] sm:$0xff]
        %v1081 = vld [vmem:[#allocation2 + $0x48] sm:$0xff]
        %v1082 = vld [vmem:[#allocation2 + $0x50] sm:$0xff]
        %v1083 = vld [vmem:[#allocation2 + $0x58] sm:$0xff]
        %v1084 = vld [vmem:[#allocation2 + $0x60] sm:$0xff]
        %v1085 = vld [vmem:[#allocation2 + $0x68] sm:$0xff]
        %v1086 = vld [vmem:[#allocation2 + $0x70] sm:$0xff]
        %v1087 = vld [vmem:[#allocation2 + $0x78] sm:$0xff]
        %v1088 = vmul.f32 %v1056, %v1072
        %v1089 = vmul.f32 %v1057, %v1073
        %v1090 = vmul.f32 %v1058, %v1074
        %v1091 = vmul.f32 %v1059, %v1075
        %v1092 = vmul.f32 %v1060, %v1076
        %v1093 = vmul.f32 %v1061, %v1077
        %v1094 = vmul.f32 %v1062, %v1078
        %v1095 = vmul.f32 %v1063, %v1079
        %v1096 = vmul.f32 %v1064, %v1080
        %v1097 = vmul.f32 %v1065, %v1081
        %v1098 = vmul.f32 %v1066, %v1082
        %v1099 = vmul.f32 %v1067, %v1083
        %v1100 = vmul.f32 %v1068, %v1084
        %v1101 = vmul.f32 %v1069, %v1085
        %v1102 = vmul.f32 %v1070, %v1086
        %v1103 = vmul.f32 %v1071, %v1087
        %vm1104 = vcmp.le.f32.partialorder %v1088, 0.0
        %vm1105 = vcmp.le.f32.partialorder %v1089, 0.0
        %vm1106 = vcmp.le.f32.partialorder %v1090, 0.0
        %vm1107 = vcmp.le.f32.partialorder %v1091, 0.0
        %vm1108 = vcmp.le.f32.partialorder %v1092, 0.0
        %vm1109 = vcmp.le.f32.partialorder %v1093, 0.0
        %vm1110 = vcmp.le.f32.partialorder %v1094, 0.0
        %vm1111 = vcmp.le.f32.partialorder %v1095, 0.0
        %vm1112 = vcmp.le.f32.partialorder %v1096, 0.0
        %vm1113 = vcmp.le.f32.partialorder %v1097, 0.0
        %vm1114 = vcmp.le.f32.partialorder %v1098, 0.0
        %vm1115 = vcmp.le.f32.partialorder %v1099, 0.0
        %vm1116 = vcmp.le.f32.partialorder %v1100, 0.0
        %vm1117 = vcmp.le.f32.partialorder %v1101, 0.0
        %vm1118 = vcmp.le.f32.partialorder %v1102, 0.0
        %vm1119 = vcmp.le.f32.partialorder %v1103, 0.0
        %v1120 = vsel %vm1104, 1.0, %v1088
        %v1121 = vsel %vm1105, 1.0, %v1089
        %v1122 = vsel %vm1106, 1.0, %v1090
        %v1123 = vsel %vm1107, 1.0, %v1091
        %v1124 = vsel %vm1108, 1.0, %v1092
        %v1125 = vsel %vm1109, 1.0, %v1093
        %v1126 = vsel %vm1110, 1.0, %v1094
        %v1127 = vsel %vm1111, 1.0, %v1095
        %v1128 = vsel %vm1112, 1.0, %v1096
        %v1129 = vsel %vm1113, 1.0, %v1097
        %v1130 = vsel %vm1114, 1.0, %v1098
        %v1131 = vsel %vm1115, 1.0, %v1099
        %v1132 = vsel %vm1116, 1.0, %v1100
        %v1133 = vsel %vm1117, 1.0, %v1101
        %v1134 = vsel %vm1118, 1.0, %v1102
        %v1135 = vsel %vm1119, 1.0, %v1103
        %v1136 = vlog2.pop %v1120
        %v1137 = vmul.f32 %v1136, 0.6931472
        %v1138 = vlog2.pop %v1121
        %v1139 = vmul.f32 %v1138, 0.6931472
        %v1140 = vlog2.pop %v1122
        %v1141 = vmul.f32 %v1140, 0.6931472
        %v1142 = vlog2.pop %v1123
        %v1143 = vmul.f32 %v1142, 0.6931472
        %v1144 = vlog2.pop %v1124
        %v1145 = vmul.f32 %v1144, 0.6931472
        %v1146 = vlog2.pop %v1125
        %v1147 = vmul.f32 %v1146, 0.6931472
        %v1148 = vlog2.pop %v1126
        %v1149 = vmul.f32 %v1148, 0.6931472
        %v1150 = vlog2.pop %v1127
        %v1151 = vmul.f32 %v1150, 0.6931472
        %v1152 = vlog2.pop %v1128
        %v1153 = vmul.f32 %v1152, 0.6931472
        %v1154 = vlog2.pop %v1129
        %v1155 = vmul.f32 %v1154, 0.6931472
        %v1156 = vlog2.pop %v1130
        %v1157 = vmul.f32 %v1156, 0.6931472
        %v1158 = vlog2.pop %v1131
        %v1159 = vmul.f32 %v1158, 0.6931472
        %v1160 = vlog2.pop %v1132
        %v1161 = vmul.f32 %v1160, 0.6931472
        %v1162 = vlog2.pop %v1133
        %v1163 = vmul.f32 %v1162, 0.6931472
        %v1164 = vlog2.pop %v1134
        %v1165 = vmul.f32 %v1164, 0.6931472
        %v1166 = vlog2.pop %v1135
        %v1167 = vmul.f32 %v1166, 0.6931472
        %v1168 = vld [vmem:[%s389] sm:$0xff]
        %v1169 = vld [vmem:[%s389 + $0x8] sm:$0xff]
        %v1170 = vld [vmem:[%s389 + $0x10] sm:$0xff]
        %v1171 = vld [vmem:[%s389 + $0x18] sm:$0xff]
        %v1172 = vld [vmem:[%s389 + $0x20] sm:$0xff]
        %v1173 = vld [vmem:[%s389 + $0x28] sm:$0xff]
        %v1174 = vld [vmem:[%s389 + $0x30] sm:$0xff]
        %v1175 = vld [vmem:[%s389 + $0x38] sm:$0xff]
        %v1176 = vld [vmem:[%s389 + $0x40] sm:$0xff]
        %v1177 = vld [vmem:[%s389 + $0x48] sm:$0xff]
        %v1178 = vld [vmem:[%s389 + $0x50] sm:$0xff]
        %v1179 = vld [vmem:[%s389 + $0x58] sm:$0xff]
        %v1180 = vld [vmem:[%s389 + $0x60] sm:$0xff]
        %v1181 = vld [vmem:[%s389 + $0x68] sm:$0xff]
        %v1182 = vld [vmem:[%s389 + $0x70] sm:$0xff]
        %v1183 = vld [vmem:[%s389 + $0x78] sm:$0xff]
        %v1184 = vmul.f32 %v1137, %v1168
        %v1185 = vmul.f32 %v1139, %v1169
        %v1186 = vmul.f32 %v1141, %v1170
        %v1187 = vmul.f32 %v1143, %v1171
        %v1188 = vmul.f32 %v1145, %v1172
        %v1189 = vmul.f32 %v1147, %v1173
        %v1190 = vmul.f32 %v1149, %v1174
        %v1191 = vmul.f32 %v1151, %v1175
        %v1192 = vmul.f32 %v1153, %v1176
        %v1193 = vmul.f32 %v1155, %v1177
        %v1194 = vmul.f32 %v1157, %v1178
        %v1195 = vmul.f32 %v1159, %v1179
        %v1196 = vmul.f32 %v1161, %v1180
        %v1197 = vmul.f32 %v1163, %v1181
        %v1198 = vmul.f32 %v1165, %v1182
        %v1199 = vmul.f32 %v1167, %v1183
        %v1200 = vsel %vm850, %v1184, 0.0
        %v1201 = vsel %vm850, %v1185, 0.0
        %v1202 = vadd.f32 %v1200, %v1201
        %v1203 = vsel %vm850, %v1186, 0.0
        %v1204 = vadd.f32 %v1202, %v1203
        %v1205 = vsel %vm850, %v1187, 0.0
        %v1206 = vadd.f32 %v1204, %v1205
        %v1207 = vsel %vm850, %v1188, 0.0
        %v1208 = vadd.f32 %v1206, %v1207
        %v1209 = vsel %vm850, %v1189, 0.0
        %v1210 = vadd.f32 %v1208, %v1209
        %v1211 = vsel %vm850, %v1190, 0.0
        %v1212 = vadd.f32 %v1210, %v1211
        %v1213 = vsel %vm850, %v1191, 0.0
        %v1214 = vadd.f32 %v1212, %v1213
        %v1215 = vsel %vm850, %v1192, 0.0
        %v1216 = vadd.f32 %v1214, %v1215
        %v1217 = vsel %vm850, %v1193, 0.0
        %v1218 = vadd.f32 %v1216, %v1217
        %v1219 = vsel %vm850, %v1194, 0.0
        %v1220 = vadd.f32 %v1218, %v1219
        %v1221 = vsel %vm850, %v1195, 0.0
        %v1222 = vadd.f32 %v1220, %v1221
        %v1223 = vsel %vm850, %v1196, 0.0
        %v1224 = vadd.f32 %v1222, %v1223
        %v1225 = vsel %vm850, %v1197, 0.0
        %v1226 = vadd.f32 %v1224, %v1225
        %v1227 = vsel %vm850, %v1198, 0.0
        %v1228 = vadd.f32 %v1226, %v1227
        %v1229 = vsel %vm850, %v1199, 0.0
        %v1230 = vadd.f32 %v1228, %v1229
        %1231 = vadd.xlane.f32.xlu0 %v1230
        %v1232 = vpop.xlane.xlu0 %1231
        %v1233 = vrot.slane %v1232, 4
        %v1234 = vadd.f32 %v1232, %v1233
        %v1235 = vrot.slane %v1234, 2
        %v1236 = vadd.f32 %v1234, %v1235
        %v1237 = vrot.slane %v1236, 1
        %v1238 = vadd.f32 %v1236, %v1237
        %s1239 = vtos %v1238
        %v1240 = vstv %s1239
        %vm1241 = vcmask 0
        %1242 = vst.msk [vmem:[%s396] sm:$0x1] %vm1241, %v1240
      $region56: #{tpu_custom_call.1} parent=43 // pred_fallthru
        _
      %p1243 = scmp.lt.s32.totalorder %s22, 3
      %s1244 = scalar_select %p1243, %s22, 3
      %p1245 = scmp.lt.s32.totalorder %s23, 0
      %s1246 = scalar_select %p1245, %s23, 0
      %s1247 = sadd.s32 %s1246, %s1244
      %s1248 = scalar_lea.vmem %s6, %s1247
      // Predicated region
      $region57: #{tpu_custom_call.1} parent=43 // pred_check
        %p1249 = pneg %p213
      $region58: #{tpu_custom_call.1} parent=43 // pred_check_branch
        %1251 = sbr.rel (%p1249) target = $region60
      $region59: #{tpu_custom_call.1} parent=43 // pred_region
        _
      $region60: #{tpu_custom_call.1} parent=43 // pred_fallthru
        _
    $region44: #{tpu_custom_call.1} parent=5 // pred_fallthru
      _
    %p1252 = scmp.le.s32.totalorder 2, %s12
    // Predicated region
    $region61: #{tpu_custom_call.1} parent=5 // pred_check
      %p1253 = pneg %p1252
    $region62: #{tpu_custom_call.1} parent=5 // pred_check_branch
      %1255 = sbr.rel (%p1253) target = $region64
    $region63: #{tpu_custom_call.1} parent=5 // pred_region
      %s1256 = ssub.s32 %s12, 2
      // Predicated region
      $region65: #{tpu_custom_call.1} parent=63 // pred_check
        %p1257 = pneg %p219
      $region66: #{tpu_custom_call.1} parent=63 // pred_check_branch
        %1259 = sbr.rel (%p1257) target = $region68
      $region67: #{tpu_custom_call.1} parent=63 // pred_region
        %p1260 = scmp.lt.s32.totalorder %s25, 3
        %s1261 = scalar_select %p1260, %s25, 3
        %p1262 = scmp.lt.s32.totalorder %s26, 0
        %s1263 = scalar_select %p1262, %s26, 0
        %s1264 = sadd.s32 %s1263, %s1261
        %s1265 = scalar_lea.vmem %s6, %s1264
      $region68: #{tpu_custom_call.1} parent=63 // pred_fallthru
        _
    $region64: #{tpu_custom_call.1} parent=5 // pred_fallthru
      _
  $region6: #{tpu_custom_call.1} parent=0 // loop_footer
    %s16 = sadd.s32 1, %s12
  $region7: #{tpu_custom_call.1} parent=0 // loop_footer_branch
    %11 = sbr.rel target = $region3
  $region8: #{tpu_custom_call.1} parent=0 // loop_exit
    _

</llo_original>
